<compile_context>
chip_gen: v7x
topology: tpu7x:2x2x1
jax: 0.10.0
libtpu: 0.0.40
codegen_flags: <defaults>
</compile_context>

<pallas_src>
import jax
import jax.numpy as jnp
from jax.experimental import pallas as pl
from jax.experimental.pallas import tpu as pltpu


def sent_level_rnn_kernel(
    xcat_ref,         # (S, B, 2I)  per step: [x_t | x_{S-1-t}] (fwd / bwd inputs paired)
    wih_ref,          # (2I, 6H)    block-diag input proj, cols [r_f r_b | z_f z_b | n_f n_b]
    bias_ref,         # (1, 6H)     bih (+ bhh for r/z) folded, same column layout
    whh_ref,          # (2H, 6H)    block-diag recurrent weights, same column layout
    bhhn_ref,         # (1, 2H)     n-gate hidden bias [fwd | bwd] (stays under r*)
    wlin_ref, blin_ref, ctx_ref, wfc_ref, bfc_ref,   # attention + classifier
    out_ref,          # (B, C)
    gi_ref,           # VMEM scratch (S*B, 6H): precomputed gate inputs, all steps
    hf_ref,           # VMEM scratch (S*B, H):  forward hidden states, by time
    hb_ref,           # VMEM scratch (S*B, H):  backward hidden states, by time
):
    S, B, I2 = xcat_ref.shape
    H2 = whh_ref.shape[0]          # 2H
    H = H2 // 2

    # ---- hoisted input projection: both directions, all timesteps, one matmul ----
    x2 = xcat_ref[...].reshape(S * B, I2)                             # (S*B, 2I)
    gi_ref[...] = (jnp.dot(x2, wih_ref[...],
                           preferred_element_type=jnp.float32)
                   + bias_ref[...])                                   # (S*B, 6H)

    whh = whh_ref[...]                                                # (2H, 6H)
    bhhn = bhhn_ref[...]                                              # (1, 2H)

    # ---- merged fwd/bwd recurrence: one (B,2H)@(2H,6H) dot per step, gate math
    #      on fused (B,2H) slabs; statically unrolled (S is small & static) ----
    h = jnp.zeros((B, H2), jnp.float32)                               # [h_f | h_b]
    for s in range(S):
        gi = gi_ref[s * B:(s + 1) * B, :]                             # (B, 6H)
        gh = jnp.dot(h, whh, preferred_element_type=jnp.float32)      # (B, 6H)
        r = jax.nn.sigmoid(gi[:, 0:H2] + gh[:, 0:H2])
        z = jax.nn.sigmoid(gi[:, H2:2 * H2] + gh[:, H2:2 * H2])
        n = jnp.tanh(gi[:, 2 * H2:3 * H2] + r * (gh[:, 2 * H2:3 * H2] + bhhn))
        h = (1.0 - z) * n + z * h
        # row-aligned, lane-0 stores into per-direction scratches
        hf_ref[s * B:(s + 1) * B, :] = h[:, 0:H]                      # time s
        hb_ref[(S - 1 - s) * B:(S - s) * B, :] = h[:, H:H2]           # time S-1-s

    hf = hf_ref[...]                                                  # (S*B, H)
    hb = hb_ref[...]                                                  # (S*B, H)

    # ---- attention: tanh(Linear([hf|hb])) . ctx, softmax over S.
    #      wlin split into top/bottom H rows so no concat is materialized. ----
    t_ = jnp.tanh(jnp.dot(hf, wlin_ref[0:H, :], preferred_element_type=jnp.float32)
                  + jnp.dot(hb, wlin_ref[H:H2, :], preferred_element_type=jnp.float32)
                  + blin_ref[...])                                    # (S*B, 2H)
    scores = jnp.sum(t_ * ctx_ref[...], axis=-1, keepdims=True)      # (S*B, 1)
    scores = scores.reshape(S, B, 1)
    scores = scores - jnp.max(scores, axis=0, keepdims=True)
    e = jnp.exp(scores)
    attn = e * pl.reciprocal(jnp.sum(e, axis=0, keepdims=True), approx=True)

    # ---- attention-weighted pooling over S, then classifier (split halves) ----
    pooled_f = jnp.sum(hf.reshape(S, B, H) * attn, axis=0)            # (B, H)
    pooled_b = jnp.sum(hb.reshape(S, B, H) * attn, axis=0)            # (B, H)
    out_ref[...] = (jnp.dot(pooled_f, wfc_ref[0:H, :], preferred_element_type=jnp.float32)
                    + jnp.dot(pooled_b, wfc_ref[H:H2, :], preferred_element_type=jnp.float32)
                    + bfc_ref[...])


def sent_level_rnn(x, p):
    S, B, I = x.shape
    H = p["whh_f"].shape[0]
    C = p["wfc"].shape[1]
    f32 = jnp.float32

    def gates(w):  # (K, 3H) -> r, z, n column blocks, each (K, H)
        return w[:, 0:H], w[:, H:2 * H], w[:, 2 * H:3 * H]

    # ---- one-time parameter packing (wrapper-side) ----
    # Input projection, block-diagonal over the paired [x_t | x_{S-1-t}] input,
    # gate columns interleaved across directions: [r_f r_b | z_f z_b | n_f n_b].
    ir_f, iz_f, in_f = gates(p["wih_f"])
    ir_b, iz_b, in_b = gates(p["wih_b"])
    ZI = jnp.zeros((I, H), f32)
    wih_pack = jnp.concatenate([
        jnp.concatenate([ir_f, ZI, iz_f, ZI, in_f, ZI], axis=1),     # rows 0:I  (fwd)
        jnp.concatenate([ZI, ir_b, ZI, iz_b, ZI, in_b], axis=1),     # rows I:2I (bwd)
    ], axis=0)                                                        # (2I, 6H)

    # Recurrent weights: block-diag over the fused hidden state [h_f | h_b].
    hr_f, hz_f, hn_f = gates(p["whh_f"])
    hr_b, hz_b, hn_b = gates(p["whh_b"])
    ZH = jnp.zeros((H, H), f32)
    whh_pack = jnp.concatenate([
        jnp.concatenate([hr_f, ZH, hz_f, ZH, hn_f, ZH], axis=1),     # rows 0:H  (h_f)
        jnp.concatenate([ZH, hr_b, ZH, hz_b, ZH, hn_b], axis=1),     # rows H:2H (h_b)
    ], axis=0)                                                        # (2H, 6H)

    # Biases: fold bih (all gates) and bhh (r,z only!) into the precomputed gi;
    # the n-gate hidden bias stays inside the recurrence (multiplied by r).
    bir_f, biz_f, bin_f = gates(p["bih_f"])
    bir_b, biz_b, bin_b = gates(p["bih_b"])
    bhr_f, bhz_f, bhn_f = gates(p["bhh_f"])
    bhr_b, bhz_b, bhn_b = gates(p["bhh_b"])
    bias_pack = jnp.concatenate([
        bir_f + bhr_f, bir_b + bhr_b,
        biz_f + bhz_f, biz_b + bhz_b,
        bin_f, bin_b,
    ], axis=1)                                                        # (1, 6H)
    bhhn_pack = jnp.concatenate([bhn_f, bhn_b], axis=1)               # (1, 2H)

    # Pair forward input x[s] with backward input x[S-1-s] once, so the hoisted
    # projection emits gi rows already in recurrence order for BOTH directions
    # (no in-kernel flip / relayout).
    xcat = jnp.concatenate([x, x[::-1]], axis=-1)                     # (S, B, 2I)

    args = [
        xcat, wih_pack, bias_pack, whh_pack, bhhn_pack,
        p["wlin"], p["blin"], p["ctx"], p["wfc"], p["bfc"],
    ]
    vmem = lambda: pl.BlockSpec(memory_space=pltpu.MemorySpace.VMEM)
    return pl.pallas_call(
        sent_level_rnn_kernel,
        out_shape=jax.ShapeDtypeStruct((B, C), f32),
        in_specs=[vmem() for _ in args],
        out_specs=vmem(),
        scratch_shapes=[
            pltpu.VMEM((S * B, 6 * H), f32),   # precomputed gate inputs (all steps)
            pltpu.VMEM((S * B, H), f32),       # forward hidden states
            pltpu.VMEM((S * B, H), f32),       # backward hidden states
        ],
    )(*args)


def sent_level_rnn_ref(x, p):
    """Pure-JAX reference mirroring the PyTorch forward exactly."""
    S, B, I = x.shape
    H = p["whh_f"].shape[0]

    def cell(xt, h, wih, whh, bih, bhh):
        gi = xt @ wih + bih
        gh = h @ whh + bhh
        r = jax.nn.sigmoid(gi[:, :H] + gh[:, :H])
        z = jax.nn.sigmoid(gi[:, H:2 * H] + gh[:, H:2 * H])
        n = jnp.tanh(gi[:, 2 * H:] + r * gh[:, 2 * H:])
        return (1.0 - z) * n + z * h

    h = jnp.zeros((B, H), jnp.float32)
    hs_f = []
    for t in range(S):
        h = cell(x[t], h, p["wih_f"], p["whh_f"], p["bih_f"], p["bhh_f"])
        hs_f.append(h)
    h = jnp.zeros((B, H), jnp.float32)
    hs_b = [None] * S
    for t in range(S - 1, -1, -1):
        h = cell(x[t], h, p["wih_b"], p["whh_b"], p["bih_b"], p["bhh_b"])
        hs_b[t] = h
    sent_h = jnp.concatenate([jnp.stack(hs_f), jnp.stack(hs_b)], axis=-1)  # (S,B,2H)

    t_ = jnp.tanh(sent_h @ p["wlin"] + p["blin"])
    scores = jnp.sum(t_ * p["ctx"], axis=-1)             # (S, B)
    attn = jax.nn.softmax(scores, axis=0)                # softmax over S
    pooled = jnp.sum(sent_h * attn[:, :, None], axis=0)  # (B, 2H)
    return pooled @ p["wfc"] + p["bfc"]                  # (B, C)


if __name__ == "__main__":
    key = jax.random.PRNGKey(0)
    S, B = 8, 8
    word_num_hidden = 16
    sentence_num_hidden = 32
    target_class = 4
    I = 2 * word_num_hidden        # GRU input size
    H = sentence_num_hidden        # GRU hidden size (per direction)
    C = target_class

    ks = jax.random.split(key, 16)

    def u(k, shape, bound):
        return jax.random.uniform(k, shape, jnp.float32, -bound, bound)

    gb = 1.0 / (H ** 0.5)          # PyTorch GRU init range
    lb = 1.0 / ((2 * H) ** 0.5)    # PyTorch Linear init range

    params = {
        # GRU weights stored transposed (in, 3H) so kernel does x @ W; gate order r,z,n
        "wih_f": u(ks[0], (I, 3 * H), gb), "whh_f": u(ks[1], (H, 3 * H), gb),
        "bih_f": u(ks[2], (1, 3 * H), gb), "bhh_f": u(ks[3], (1, 3 * H), gb),
        "wih_b": u(ks[4], (I, 3 * H), gb), "whh_b": u(ks[5], (H, 3 * H), gb),
        "bih_b": u(ks[6], (1, 3 * H), gb), "bhh_b": u(ks[7], (1, 3 * H), gb),
        # sentence_linear: (2H -> 2H), stored as (in, out)
        "wlin": u(ks[8], (2 * H, 2 * H), lb), "blin": u(ks[9], (1, 2 * H), lb),
        # sentence_context_wghts: torch.rand(2H,1).uniform_(-0.1,0.1); stored as (1, 2H)
        "ctx": u(ks[10], (1, 2 * H), 0.1),
        # fc: (2H -> C), stored as (in, out)
        "wfc": u(ks[11], (2 * H, C), lb), "bfc": u(ks[12], (1, C), lb),
    }

    x = jax.random.normal(ks[13], (S, B, I), jnp.float32)

    out = sent_level_rnn(x, params)
    out = jax.block_until_ready(out)

    ref = sent_level_rnn_ref(x, params)
    if not jnp.allclose(out, ref, atol=2e-3, rtol=2e-3):
        raise AssertionError(f"mismatch: max abs err {jnp.max(jnp.abs(out - ref))}")

    print("KERNEL_OK")
</pallas_src>

<mosaic_0001>
module attributes {stable_mosaic.version = 11 : i64} {
  func.func @sent_level_rnn_kernel(%arg0: memref<8x8x64xf32, #tpu.memory_space<vmem>>, %arg1: memref<64x192xf32, #tpu.memory_space<vmem>>, %arg2: memref<1x192xf32, #tpu.memory_space<vmem>>, %arg3: memref<64x192xf32, #tpu.memory_space<vmem>>, %arg4: memref<1x64xf32, #tpu.memory_space<vmem>>, %arg5: memref<64x64xf32, #tpu.memory_space<vmem>>, %arg6: memref<1x64xf32, #tpu.memory_space<vmem>>, %arg7: memref<1x64xf32, #tpu.memory_space<vmem>>, %arg8: memref<64x4xf32, #tpu.memory_space<vmem>>, %arg9: memref<1x4xf32, #tpu.memory_space<vmem>>, %arg10: memref<8x4xf32, #tpu.memory_space<vmem>>, %arg11: memref<64x192xf32, #tpu.memory_space<vmem>>, %arg12: memref<64x32xf32, #tpu.memory_space<vmem>>, %arg13: memref<64x32xf32, #tpu.memory_space<vmem>>) attributes {dimension_semantics = [], scalar_prefetch = 0 : i64, scratch_operands = 3 : i64, tpu.core_type = #tpu.core_type<tc>} {
    %c0 = arith.constant 0 : index
    %c0_0 = arith.constant 0 : index
    %c0_1 = arith.constant 0 : index
    %0 = vector.load %arg0[%c0, %c0_0, %c0_1] : memref<8x8x64xf32, #tpu.memory_space<vmem>>, vector<8x8x64xf32>
    %1 = vector.shape_cast %0 : vector<8x8x64xf32> to vector<64x64xf32>
    %c0_2 = arith.constant 0 : index
    %c0_3 = arith.constant 0 : index
    %2 = vector.load %arg1[%c0_2, %c0_3] : memref<64x192xf32, #tpu.memory_space<vmem>>, vector<64x192xf32>
    %cst = arith.constant dense<0.000000e+00> : vector<64x192xf32>
    %3 = tpu.matmul %1, %2, %cst {dimension_numbers = #tpu.dot_dimension_numbers<[1], [0], [0], [1], [0, 0, 1, 1], [], []>} : vector<64x64xf32>, vector<64x192xf32>, vector<64x192xf32> -> vector<64x192xf32>
    %c0_4 = arith.constant 0 : index
    %c0_5 = arith.constant 0 : index
    %4 = vector.load %arg2[%c0_4, %c0_5] : memref<1x192xf32, #tpu.memory_space<vmem>>, vector<1x192xf32>
    %5 = vector.broadcast %4 : vector<1x192xf32> to vector<64x192xf32>
    %6 = arith.addf %3, %5 : vector<64x192xf32>
    %c0_6 = arith.constant 0 : index
    %c0_7 = arith.constant 0 : index
    %7 = vector.load %arg11[%c0_6, %c0_7] : memref<64x192xf32, #tpu.memory_space<vmem>>, vector<64x192xf32>
    tpu.vector_store %arg11[%c0_6, %c0_7], %6 {strides = array<i32>} : memref<64x192xf32, #tpu.memory_space<vmem>>, vector<64x192xf32>,
    %c0_8 = arith.constant 0 : index
    %c0_9 = arith.constant 0 : index
    %8 = vector.load %arg3[%c0_8, %c0_9] : memref<64x192xf32, #tpu.memory_space<vmem>>, vector<64x192xf32>
    %c0_10 = arith.constant 0 : index
    %c0_11 = arith.constant 0 : index
    %9 = vector.load %arg4[%c0_10, %c0_11] : memref<1x64xf32, #tpu.memory_space<vmem>>, vector<1x64xf32>
    %cst_12 = arith.constant 0.000000e+00 : f32
    %10 = vector.broadcast %cst_12 : f32 to vector<8x64xf32>
    %c0_13 = arith.constant 0 : index
    %c0_14 = arith.constant 0 : index
    %11 = vector.load %arg11[%c0_13, %c0_14] : memref<64x192xf32, #tpu.memory_space<vmem>>, vector<8x192xf32>
    %cst_15 = arith.constant dense<0.000000e+00> : vector<8x192xf32>
    %12 = tpu.matmul %10, %8, %cst_15 {dimension_numbers = #tpu.dot_dimension_numbers<[1], [0], [0], [1], [0, 0, 1, 1], [], []>} : vector<8x64xf32>, vector<64x192xf32>, vector<8x192xf32> -> vector<8x192xf32>
    %13 = vector.extract_strided_slice %11 {offsets = [0, 0], sizes = [8, 64], strides = [1, 1]} : vector<8x192xf32> to vector<8x64xf32>
    %14 = vector.extract_strided_slice %12 {offsets = [0, 0], sizes = [8, 64], strides = [1, 1]} : vector<8x192xf32> to vector<8x64xf32>
    %15 = arith.addf %13, %14 : vector<8x64xf32>
    %16 = arith.negf %15 : vector<8x64xf32>
    %17 = math.exp %16 : vector<8x64xf32>
    %cst_16 = arith.constant 1.000000e+00 : f32
    %18 = vector.broadcast %cst_16 : f32 to vector<8x64xf32>
    %19 = arith.addf %18, %17 : vector<8x64xf32>
    %20 = arith.divf %18, %19 : vector<8x64xf32>
    %21 = vector.extract_strided_slice %11 {offsets = [0, 64], sizes = [8, 64], strides = [1, 1]} : vector<8x192xf32> to vector<8x64xf32>
    %22 = vector.extract_strided_slice %12 {offsets = [0, 64], sizes = [8, 64], strides = [1, 1]} : vector<8x192xf32> to vector<8x64xf32>
    %23 = arith.addf %21, %22 : vector<8x64xf32>
    %24 = arith.negf %23 : vector<8x64xf32>
    %25 = math.exp %24 : vector<8x64xf32>
    %cst_17 = arith.constant 1.000000e+00 : f32
    %26 = vector.broadcast %cst_17 : f32 to vector<8x64xf32>
    %27 = arith.addf %26, %25 : vector<8x64xf32>
    %28 = arith.divf %26, %27 : vector<8x64xf32>
    %29 = vector.extract_strided_slice %11 {offsets = [0, 128], sizes = [8, 64], strides = [1, 1]} : vector<8x192xf32> to vector<8x64xf32>
    %30 = vector.extract_strided_slice %12 {offsets = [0, 128], sizes = [8, 64], strides = [1, 1]} : vector<8x192xf32> to vector<8x64xf32>
    %31 = vector.broadcast %9 : vector<1x64xf32> to vector<8x64xf32>
    %32 = arith.addf %30, %31 : vector<8x64xf32>
    %33 = arith.mulf %20, %32 : vector<8x64xf32>
    %34 = arith.addf %29, %33 : vector<8x64xf32>
    %35 = math.tanh %34 : vector<8x64xf32>
    %cst_18 = arith.constant 1.000000e+00 : f32
    %36 = vector.broadcast %cst_18 : f32 to vector<8x64xf32>
    %37 = arith.subf %36, %28 : vector<8x64xf32>
    %38 = arith.mulf %37, %35 : vector<8x64xf32>
    %39 = arith.mulf %28, %10 : vector<8x64xf32>
    %40 = arith.addf %38, %39 : vector<8x64xf32>
    %41 = vector.extract_strided_slice %40 {offsets = [0, 0], sizes = [8, 32], strides = [1, 1]} : vector<8x64xf32> to vector<8x32xf32>
    %c0_19 = arith.constant 0 : index
    %c0_20 = arith.constant 0 : index
    %42 = vector.load %arg12[%c0_19, %c0_20] : memref<64x32xf32, #tpu.memory_space<vmem>>, vector<8x32xf32>
    tpu.vector_store %arg12[%c0_19, %c0_20], %41 {strides = array<i32>} : memref<64x32xf32, #tpu.memory_space<vmem>>, vector<8x32xf32>,
    %43 = vector.extract_strided_slice %40 {offsets = [0, 32], sizes = [8, 32], strides = [1, 1]} : vector<8x64xf32> to vector<8x32xf32>
    %c56 = arith.constant 56 : index
    %c0_21 = arith.constant 0 : index
    %44 = vector.load %arg13[%c56, %c0_21] : memref<64x32xf32, #tpu.memory_space<vmem>>, vector<8x32xf32>
    tpu.vector_store %arg13[%c56, %c0_21], %43 {strides = array<i32>} : memref<64x32xf32, #tpu.memory_space<vmem>>, vector<8x32xf32>,
    %c8 = arith.constant 8 : index
    %c0_22 = arith.constant 0 : index
    %45 = vector.load %arg11[%c8, %c0_22] : memref<64x192xf32, #tpu.memory_space<vmem>>, vector<8x192xf32>
    %cst_23 = arith.constant dense<0.000000e+00> : vector<8x192xf32>
    %46 = tpu.matmul %40, %8, %cst_23 {dimension_numbers = #tpu.dot_dimension_numbers<[1], [0], [0], [1], [0, 0, 1, 1], [], []>} : vector<8x64xf32>, vector<64x192xf32>, vector<8x192xf32> -> vector<8x192xf32>
    %47 = vector.extract_strided_slice %45 {offsets = [0, 0], sizes = [8, 64], strides = [1, 1]} : vector<8x192xf32> to vector<8x64xf32>
    %48 = vector.extract_strided_slice %46 {offsets = [0, 0], sizes = [8, 64], strides = [1, 1]} : vector<8x192xf32> to vector<8x64xf32>
    %49 = arith.addf %47, %48 : vector<8x64xf32>
    %50 = arith.negf %49 : vector<8x64xf32>
    %51 = math.exp %50 : vector<8x64xf32>
    %cst_24 = arith.constant 1.000000e+00 : f32
    %52 = vector.broadcast %cst_24 : f32 to vector<8x64xf32>
    %53 = arith.addf %52, %51 : vector<8x64xf32>
    %54 = arith.divf %52, %53 : vector<8x64xf32>
    %55 = vector.extract_strided_slice %45 {offsets = [0, 64], sizes = [8, 64], strides = [1, 1]} : vector<8x192xf32> to vector<8x64xf32>
    %56 = vector.extract_strided_slice %46 {offsets = [0, 64], sizes = [8, 64], strides = [1, 1]} : vector<8x192xf32> to vector<8x64xf32>
    %57 = arith.addf %55, %56 : vector<8x64xf32>
    %58 = arith.negf %57 : vector<8x64xf32>
    %59 = math.exp %58 : vector<8x64xf32>
    %cst_25 = arith.constant 1.000000e+00 : f32
    %60 = vector.broadcast %cst_25 : f32 to vector<8x64xf32>
    %61 = arith.addf %60, %59 : vector<8x64xf32>
    %62 = arith.divf %60, %61 : vector<8x64xf32>
    %63 = vector.extract_strided_slice %45 {offsets = [0, 128], sizes = [8, 64], strides = [1, 1]} : vector<8x192xf32> to vector<8x64xf32>
    %64 = vector.extract_strided_slice %46 {offsets = [0, 128], sizes = [8, 64], strides = [1, 1]} : vector<8x192xf32> to vector<8x64xf32>
    %65 = vector.broadcast %9 : vector<1x64xf32> to vector<8x64xf32>
    %66 = arith.addf %64, %65 : vector<8x64xf32>
    %67 = arith.mulf %54, %66 : vector<8x64xf32>
    %68 = arith.addf %63, %67 : vector<8x64xf32>
    %69 = math.tanh %68 : vector<8x64xf32>
    %cst_26 = arith.constant 1.000000e+00 : f32
    %70 = vector.broadcast %cst_26 : f32 to vector<8x64xf32>
    %71 = arith.subf %70, %62 : vector<8x64xf32>
    %72 = arith.mulf %71, %69 : vector<8x64xf32>
    %73 = arith.mulf %62, %40 : vector<8x64xf32>
    %74 = arith.addf %72, %73 : vector<8x64xf32>
    %75 = vector.extract_strided_slice %74 {offsets = [0, 0], sizes = [8, 32], strides = [1, 1]} : vector<8x64xf32> to vector<8x32xf32>
    %c8_27 = arith.constant 8 : index
    %c0_28 = arith.constant 0 : index
    %76 = vector.load %arg12[%c8_27, %c0_28] : memref<64x32xf32, #tpu.memory_space<vmem>>, vector<8x32xf32>
    tpu.vector_store %arg12[%c8_27, %c0_28], %75 {strides = array<i32>} : memref<64x32xf32, #tpu.memory_space<vmem>>, vector<8x32xf32>,
    %77 = vector.extract_strided_slice %74 {offsets = [0, 32], sizes = [8, 32], strides = [1, 1]} : vector<8x64xf32> to vector<8x32xf32>
    %c48 = arith.constant 48 : index
    %c0_29 = arith.constant 0 : index
    %78 = vector.load %arg13[%c48, %c0_29] : memref<64x32xf32, #tpu.memory_space<vmem>>, vector<8x32xf32>
    tpu.vector_store %arg13[%c48, %c0_29], %77 {strides = array<i32>} : memref<64x32xf32, #tpu.memory_space<vmem>>, vector<8x32xf32>,
    %c16 = arith.constant 16 : index
    %c0_30 = arith.constant 0 : index
    %79 = vector.load %arg11[%c16, %c0_30] : memref<64x192xf32, #tpu.memory_space<vmem>>, vector<8x192xf32>
    %cst_31 = arith.constant dense<0.000000e+00> : vector<8x192xf32>
    %80 = tpu.matmul %74, %8, %cst_31 {dimension_numbers = #tpu.dot_dimension_numbers<[1], [0], [0], [1], [0, 0, 1, 1], [], []>} : vector<8x64xf32>, vector<64x192xf32>, vector<8x192xf32> -> vector<8x192xf32>
    %81 = vector.extract_strided_slice %79 {offsets = [0, 0], sizes = [8, 64], strides = [1, 1]} : vector<8x192xf32> to vector<8x64xf32>
    %82 = vector.extract_strided_slice %80 {offsets = [0, 0], sizes = [8, 64], strides = [1, 1]} : vector<8x192xf32> to vector<8x64xf32>
    %83 = arith.addf %81, %82 : vector<8x64xf32>
    %84 = arith.negf %83 : vector<8x64xf32>
    %85 = math.exp %84 : vector<8x64xf32>
    %cst_32 = arith.constant 1.000000e+00 : f32
    %86 = vector.broadcast %cst_32 : f32 to vector<8x64xf32>
    %87 = arith.addf %86, %85 : vector<8x64xf32>
    %88 = arith.divf %86, %87 : vector<8x64xf32>
    %89 = vector.extract_strided_slice %79 {offsets = [0, 64], sizes = [8, 64], strides = [1, 1]} : vector<8x192xf32> to vector<8x64xf32>
    %90 = vector.extract_strided_slice %80 {offsets = [0, 64], sizes = [8, 64], strides = [1, 1]} : vector<8x192xf32> to vector<8x64xf32>
    %91 = arith.addf %89, %90 : vector<8x64xf32>
    %92 = arith.negf %91 : vector<8x64xf32>
    %93 = math.exp %92 : vector<8x64xf32>
    %cst_33 = arith.constant 1.000000e+00 : f32
    %94 = vector.broadcast %cst_33 : f32 to vector<8x64xf32>
    %95 = arith.addf %94, %93 : vector<8x64xf32>
    %96 = arith.divf %94, %95 : vector<8x64xf32>
    %97 = vector.extract_strided_slice %79 {offsets = [0, 128], sizes = [8, 64], strides = [1, 1]} : vector<8x192xf32> to vector<8x64xf32>
    %98 = vector.extract_strided_slice %80 {offsets = [0, 128], sizes = [8, 64], strides = [1, 1]} : vector<8x192xf32> to vector<8x64xf32>
    %99 = vector.broadcast %9 : vector<1x64xf32> to vector<8x64xf32>
    %100 = arith.addf %98, %99 : vector<8x64xf32>
    %101 = arith.mulf %88, %100 : vector<8x64xf32>
    %102 = arith.addf %97, %101 : vector<8x64xf32>
    %103 = math.tanh %102 : vector<8x64xf32>
    %cst_34 = arith.constant 1.000000e+00 : f32
    %104 = vector.broadcast %cst_34 : f32 to vector<8x64xf32>
    %105 = arith.subf %104, %96 : vector<8x64xf32>
    %106 = arith.mulf %105, %103 : vector<8x64xf32>
    %107 = arith.mulf %96, %74 : vector<8x64xf32>
    %108 = arith.addf %106, %107 : vector<8x64xf32>
    %109 = vector.extract_strided_slice %108 {offsets = [0, 0], sizes = [8, 32], strides = [1, 1]} : vector<8x64xf32> to vector<8x32xf32>
    %c16_35 = arith.constant 16 : index
    %c0_36 = arith.constant 0 : index
    %110 = vector.load %arg12[%c16_35, %c0_36] : memref<64x32xf32, #tpu.memory_space<vmem>>, vector<8x32xf32>
    tpu.vector_store %arg12[%c16_35, %c0_36], %109 {strides = array<i32>} : memref<64x32xf32, #tpu.memory_space<vmem>>, vector<8x32xf32>,
    %111 = vector.extract_strided_slice %108 {offsets = [0, 32], sizes = [8, 32], strides = [1, 1]} : vector<8x64xf32> to vector<8x32xf32>
    %c40 = arith.constant 40 : index
    %c0_37 = arith.constant 0 : index
    %112 = vector.load %arg13[%c40, %c0_37] : memref<64x32xf32, #tpu.memory_space<vmem>>, vector<8x32xf32>
    tpu.vector_store %arg13[%c40, %c0_37], %111 {strides = array<i32>} : memref<64x32xf32, #tpu.memory_space<vmem>>, vector<8x32xf32>,
    %c24 = arith.constant 24 : index
    %c0_38 = arith.constant 0 : index
    %113 = vector.load %arg11[%c24, %c0_38] : memref<64x192xf32, #tpu.memory_space<vmem>>, vector<8x192xf32>
    %cst_39 = arith.constant dense<0.000000e+00> : vector<8x192xf32>
    %114 = tpu.matmul %108, %8, %cst_39 {dimension_numbers = #tpu.dot_dimension_numbers<[1], [0], [0], [1], [0, 0, 1, 1], [], []>} : vector<8x64xf32>, vector<64x192xf32>, vector<8x192xf32> -> vector<8x192xf32>
    %115 = vector.extract_strided_slice %113 {offsets = [0, 0], sizes = [8, 64], strides = [1, 1]} : vector<8x192xf32> to vector<8x64xf32>
    %116 = vector.extract_strided_slice %114 {offsets = [0, 0], sizes = [8, 64], strides = [1, 1]} : vector<8x192xf32> to vector<8x64xf32>
    %117 = arith.addf %115, %116 : vector<8x64xf32>
    %118 = arith.negf %117 : vector<8x64xf32>
    %119 = math.exp %118 : vector<8x64xf32>
    %cst_40 = arith.constant 1.000000e+00 : f32
    %120 = vector.broadcast %cst_40 : f32 to vector<8x64xf32>
    %121 = arith.addf %120, %119 : vector<8x64xf32>
    %122 = arith.divf %120, %121 : vector<8x64xf32>
    %123 = vector.extract_strided_slice %113 {offsets = [0, 64], sizes = [8, 64], strides = [1, 1]} : vector<8x192xf32> to vector<8x64xf32>
    %124 = vector.extract_strided_slice %114 {offsets = [0, 64], sizes = [8, 64], strides = [1, 1]} : vector<8x192xf32> to vector<8x64xf32>
    %125 = arith.addf %123, %124 : vector<8x64xf32>
    %126 = arith.negf %125 : vector<8x64xf32>
    %127 = math.exp %126 : vector<8x64xf32>
    %cst_41 = arith.constant 1.000000e+00 : f32
    %128 = vector.broadcast %cst_41 : f32 to vector<8x64xf32>
    %129 = arith.addf %128, %127 : vector<8x64xf32>
    %130 = arith.divf %128, %129 : vector<8x64xf32>
    %131 = vector.extract_strided_slice %113 {offsets = [0, 128], sizes = [8, 64], strides = [1, 1]} : vector<8x192xf32> to vector<8x64xf32>
    %132 = vector.extract_strided_slice %114 {offsets = [0, 128], sizes = [8, 64], strides = [1, 1]} : vector<8x192xf32> to vector<8x64xf32>
    %133 = vector.broadcast %9 : vector<1x64xf32> to vector<8x64xf32>
    %134 = arith.addf %132, %133 : vector<8x64xf32>
    %135 = arith.mulf %122, %134 : vector<8x64xf32>
    %136 = arith.addf %131, %135 : vector<8x64xf32>
    %137 = math.tanh %136 : vector<8x64xf32>
    %cst_42 = arith.constant 1.000000e+00 : f32
    %138 = vector.broadcast %cst_42 : f32 to vector<8x64xf32>
    %139 = arith.subf %138, %130 : vector<8x64xf32>
    %140 = arith.mulf %139, %137 : vector<8x64xf32>
    %141 = arith.mulf %130, %108 : vector<8x64xf32>
    %142 = arith.addf %140, %141 : vector<8x64xf32>
    %143 = vector.extract_strided_slice %142 {offsets = [0, 0], sizes = [8, 32], strides = [1, 1]} : vector<8x64xf32> to vector<8x32xf32>
    %c24_43 = arith.constant 24 : index
    %c0_44 = arith.constant 0 : index
    %144 = vector.load %arg12[%c24_43, %c0_44] : memref<64x32xf32, #tpu.memory_space<vmem>>, vector<8x32xf32>
    tpu.vector_store %arg12[%c24_43, %c0_44], %143 {strides = array<i32>} : memref<64x32xf32, #tpu.memory_space<vmem>>, vector<8x32xf32>,
    %145 = vector.extract_strided_slice %142 {offsets = [0, 32], sizes = [8, 32], strides = [1, 1]} : vector<8x64xf32> to vector<8x32xf32>
    %c32 = arith.constant 32 : index
    %c0_45 = arith.constant 0 : index
    %146 = vector.load %arg13[%c32, %c0_45] : memref<64x32xf32, #tpu.memory_space<vmem>>, vector<8x32xf32>
    tpu.vector_store %arg13[%c32, %c0_45], %145 {strides = array<i32>} : memref<64x32xf32, #tpu.memory_space<vmem>>, vector<8x32xf32>,
    %c32_46 = arith.constant 32 : index
    %c0_47 = arith.constant 0 : index
    %147 = vector.load %arg11[%c32_46, %c0_47] : memref<64x192xf32, #tpu.memory_space<vmem>>, vector<8x192xf32>
    %cst_48 = arith.constant dense<0.000000e+00> : vector<8x192xf32>
    %148 = tpu.matmul %142, %8, %cst_48 {dimension_numbers = #tpu.dot_dimension_numbers<[1], [0], [0], [1], [0, 0, 1, 1], [], []>} : vector<8x64xf32>, vector<64x192xf32>, vector<8x192xf32> -> vector<8x192xf32>
    %149 = vector.extract_strided_slice %147 {offsets = [0, 0], sizes = [8, 64], strides = [1, 1]} : vector<8x192xf32> to vector<8x64xf32>
    %150 = vector.extract_strided_slice %148 {offsets = [0, 0], sizes = [8, 64], strides = [1, 1]} : vector<8x192xf32> to vector<8x64xf32>
    %151 = arith.addf %149, %150 : vector<8x64xf32>
    %152 = arith.negf %151 : vector<8x64xf32>
    %153 = math.exp %152 : vector<8x64xf32>
    %cst_49 = arith.constant 1.000000e+00 : f32
    %154 = vector.broadcast %cst_49 : f32 to vector<8x64xf32>
    %155 = arith.addf %154, %153 : vector<8x64xf32>
    %156 = arith.divf %154, %155 : vector<8x64xf32>
    %157 = vector.extract_strided_slice %147 {offsets = [0, 64], sizes = [8, 64], strides = [1, 1]} : vector<8x192xf32> to vector<8x64xf32>
    %158 = vector.extract_strided_slice %148 {offsets = [0, 64], sizes = [8, 64], strides = [1, 1]} : vector<8x192xf32> to vector<8x64xf32>
    %159 = arith.addf %157, %158 : vector<8x64xf32>
    %160 = arith.negf %159 : vector<8x64xf32>
    %161 = math.exp %160 : vector<8x64xf32>
    %cst_50 = arith.constant 1.000000e+00 : f32
    %162 = vector.broadcast %cst_50 : f32 to vector<8x64xf32>
    %163 = arith.addf %162, %161 : vector<8x64xf32>
    %164 = arith.divf %162, %163 : vector<8x64xf32>
    %165 = vector.extract_strided_slice %147 {offsets = [0, 128], sizes = [8, 64], strides = [1, 1]} : vector<8x192xf32> to vector<8x64xf32>
    %166 = vector.extract_strided_slice %148 {offsets = [0, 128], sizes = [8, 64], strides = [1, 1]} : vector<8x192xf32> to vector<8x64xf32>
    %167 = vector.broadcast %9 : vector<1x64xf32> to vector<8x64xf32>
    %168 = arith.addf %166, %167 : vector<8x64xf32>
    %169 = arith.mulf %156, %168 : vector<8x64xf32>
    %170 = arith.addf %165, %169 : vector<8x64xf32>
    %171 = math.tanh %170 : vector<8x64xf32>
    %cst_51 = arith.constant 1.000000e+00 : f32
    %172 = vector.broadcast %cst_51 : f32 to vector<8x64xf32>
    %173 = arith.subf %172, %164 : vector<8x64xf32>
    %174 = arith.mulf %173, %171 : vector<8x64xf32>
    %175 = arith.mulf %164, %142 : vector<8x64xf32>
    %176 = arith.addf %174, %175 : vector<8x64xf32>
    %177 = vector.extract_strided_slice %176 {offsets = [0, 0], sizes = [8, 32], strides = [1, 1]} : vector<8x64xf32> to vector<8x32xf32>
    %c32_52 = arith.constant 32 : index
    %c0_53 = arith.constant 0 : index
    %178 = vector.load %arg12[%c32_52, %c0_53] : memref<64x32xf32, #tpu.memory_space<vmem>>, vector<8x32xf32>
    tpu.vector_store %arg12[%c32_52, %c0_53], %177 {strides = array<i32>} : memref<64x32xf32, #tpu.memory_space<vmem>>, vector<8x32xf32>,
    %179 = vector.extract_strided_slice %176 {offsets = [0, 32], sizes = [8, 32], strides = [1, 1]} : vector<8x64xf32> to vector<8x32xf32>
    %c24_54 = arith.constant 24 : index
    %c0_55 = arith.constant 0 : index
    %180 = vector.load %arg13[%c24_54, %c0_55] : memref<64x32xf32, #tpu.memory_space<vmem>>, vector<8x32xf32>
    tpu.vector_store %arg13[%c24_54, %c0_55], %179 {strides = array<i32>} : memref<64x32xf32, #tpu.memory_space<vmem>>, vector<8x32xf32>,
    %c40_56 = arith.constant 40 : index
    %c0_57 = arith.constant 0 : index
    %181 = vector.load %arg11[%c40_56, %c0_57] : memref<64x192xf32, #tpu.memory_space<vmem>>, vector<8x192xf32>
    %cst_58 = arith.constant dense<0.000000e+00> : vector<8x192xf32>
    %182 = tpu.matmul %176, %8, %cst_58 {dimension_numbers = #tpu.dot_dimension_numbers<[1], [0], [0], [1], [0, 0, 1, 1], [], []>} : vector<8x64xf32>, vector<64x192xf32>, vector<8x192xf32> -> vector<8x192xf32>
    %183 = vector.extract_strided_slice %181 {offsets = [0, 0], sizes = [8, 64], strides = [1, 1]} : vector<8x192xf32> to vector<8x64xf32>
    %184 = vector.extract_strided_slice %182 {offsets = [0, 0], sizes = [8, 64], strides = [1, 1]} : vector<8x192xf32> to vector<8x64xf32>
    %185 = arith.addf %183, %184 : vector<8x64xf32>
    %186 = arith.negf %185 : vector<8x64xf32>
    %187 = math.exp %186 : vector<8x64xf32>
    %cst_59 = arith.constant 1.000000e+00 : f32
    %188 = vector.broadcast %cst_59 : f32 to vector<8x64xf32>
    %189 = arith.addf %188, %187 : vector<8x64xf32>
    %190 = arith.divf %188, %189 : vector<8x64xf32>
    %191 = vector.extract_strided_slice %181 {offsets = [0, 64], sizes = [8, 64], strides = [1, 1]} : vector<8x192xf32> to vector<8x64xf32>
    %192 = vector.extract_strided_slice %182 {offsets = [0, 64], sizes = [8, 64], strides = [1, 1]} : vector<8x192xf32> to vector<8x64xf32>
    %193 = arith.addf %191, %192 : vector<8x64xf32>
    %194 = arith.negf %193 : vector<8x64xf32>
    %195 = math.exp %194 : vector<8x64xf32>
    %cst_60 = arith.constant 1.000000e+00 : f32
    %196 = vector.broadcast %cst_60 : f32 to vector<8x64xf32>
    %197 = arith.addf %196, %195 : vector<8x64xf32>
    %198 = arith.divf %196, %197 : vector<8x64xf32>
    %199 = vector.extract_strided_slice %181 {offsets = [0, 128], sizes = [8, 64], strides = [1, 1]} : vector<8x192xf32> to vector<8x64xf32>
    %200 = vector.extract_strided_slice %182 {offsets = [0, 128], sizes = [8, 64], strides = [1, 1]} : vector<8x192xf32> to vector<8x64xf32>
    %201 = vector.broadcast %9 : vector<1x64xf32> to vector<8x64xf32>
    %202 = arith.addf %200, %201 : vector<8x64xf32>
    %203 = arith.mulf %190, %202 : vector<8x64xf32>
    %204 = arith.addf %199, %203 : vector<8x64xf32>
    %205 = math.tanh %204 : vector<8x64xf32>
    %cst_61 = arith.constant 1.000000e+00 : f32
    %206 = vector.broadcast %cst_61 : f32 to vector<8x64xf32>
    %207 = arith.subf %206, %198 : vector<8x64xf32>
    %208 = arith.mulf %207, %205 : vector<8x64xf32>
    %209 = arith.mulf %198, %176 : vector<8x64xf32>
    %210 = arith.addf %208, %209 : vector<8x64xf32>
    %211 = vector.extract_strided_slice %210 {offsets = [0, 0], sizes = [8, 32], strides = [1, 1]} : vector<8x64xf32> to vector<8x32xf32>
    %c40_62 = arith.constant 40 : index
    %c0_63 = arith.constant 0 : index
    %212 = vector.load %arg12[%c40_62, %c0_63] : memref<64x32xf32, #tpu.memory_space<vmem>>, vector<8x32xf32>
    tpu.vector_store %arg12[%c40_62, %c0_63], %211 {strides = array<i32>} : memref<64x32xf32, #tpu.memory_space<vmem>>, vector<8x32xf32>,
    %213 = vector.extract_strided_slice %210 {offsets = [0, 32], sizes = [8, 32], strides = [1, 1]} : vector<8x64xf32> to vector<8x32xf32>
    %c16_64 = arith.constant 16 : index
    %c0_65 = arith.constant 0 : index
    %214 = vector.load %arg13[%c16_64, %c0_65] : memref<64x32xf32, #tpu.memory_space<vmem>>, vector<8x32xf32>
    tpu.vector_store %arg13[%c16_64, %c0_65], %213 {strides = array<i32>} : memref<64x32xf32, #tpu.memory_space<vmem>>, vector<8x32xf32>,
    %c48_66 = arith.constant 48 : index
    %c0_67 = arith.constant 0 : index
    %215 = vector.load %arg11[%c48_66, %c0_67] : memref<64x192xf32, #tpu.memory_space<vmem>>, vector<8x192xf32>
    %cst_68 = arith.constant dense<0.000000e+00> : vector<8x192xf32>
    %216 = tpu.matmul %210, %8, %cst_68 {dimension_numbers = #tpu.dot_dimension_numbers<[1], [0], [0], [1], [0, 0, 1, 1], [], []>} : vector<8x64xf32>, vector<64x192xf32>, vector<8x192xf32> -> vector<8x192xf32>
    %217 = vector.extract_strided_slice %215 {offsets = [0, 0], sizes = [8, 64], strides = [1, 1]} : vector<8x192xf32> to vector<8x64xf32>
    %218 = vector.extract_strided_slice %216 {offsets = [0, 0], sizes = [8, 64], strides = [1, 1]} : vector<8x192xf32> to vector<8x64xf32>
    %219 = arith.addf %217, %218 : vector<8x64xf32>
    %220 = arith.negf %219 : vector<8x64xf32>
    %221 = math.exp %220 : vector<8x64xf32>
    %cst_69 = arith.constant 1.000000e+00 : f32
    %222 = vector.broadcast %cst_69 : f32 to vector<8x64xf32>
    %223 = arith.addf %222, %221 : vector<8x64xf32>
    %224 = arith.divf %222, %223 : vector<8x64xf32>
    %225 = vector.extract_strided_slice %215 {offsets = [0, 64], sizes = [8, 64], strides = [1, 1]} : vector<8x192xf32> to vector<8x64xf32>
    %226 = vector.extract_strided_slice %216 {offsets = [0, 64], sizes = [8, 64], strides = [1, 1]} : vector<8x192xf32> to vector<8x64xf32>
    %227 = arith.addf %225, %226 : vector<8x64xf32>
    %228 = arith.negf %227 : vector<8x64xf32>
    %229 = math.exp %228 : vector<8x64xf32>
    %cst_70 = arith.constant 1.000000e+00 : f32
    %230 = vector.broadcast %cst_70 : f32 to vector<8x64xf32>
    %231 = arith.addf %230, %229 : vector<8x64xf32>
    %232 = arith.divf %230, %231 : vector<8x64xf32>
    %233 = vector.extract_strided_slice %215 {offsets = [0, 128], sizes = [8, 64], strides = [1, 1]} : vector<8x192xf32> to vector<8x64xf32>
    %234 = vector.extract_strided_slice %216 {offsets = [0, 128], sizes = [8, 64], strides = [1, 1]} : vector<8x192xf32> to vector<8x64xf32>
    %235 = vector.broadcast %9 : vector<1x64xf32> to vector<8x64xf32>
    %236 = arith.addf %234, %235 : vector<8x64xf32>
    %237 = arith.mulf %224, %236 : vector<8x64xf32>
    %238 = arith.addf %233, %237 : vector<8x64xf32>
    %239 = math.tanh %238 : vector<8x64xf32>
    %cst_71 = arith.constant 1.000000e+00 : f32
    %240 = vector.broadcast %cst_71 : f32 to vector<8x64xf32>
    %241 = arith.subf %240, %232 : vector<8x64xf32>
    %242 = arith.mulf %241, %239 : vector<8x64xf32>
    %243 = arith.mulf %232, %210 : vector<8x64xf32>
    %244 = arith.addf %242, %243 : vector<8x64xf32>
    %245 = vector.extract_strided_slice %244 {offsets = [0, 0], sizes = [8, 32], strides = [1, 1]} : vector<8x64xf32> to vector<8x32xf32>
    %c48_72 = arith.constant 48 : index
    %c0_73 = arith.constant 0 : index
    %246 = vector.load %arg12[%c48_72, %c0_73] : memref<64x32xf32, #tpu.memory_space<vmem>>, vector<8x32xf32>
    tpu.vector_store %arg12[%c48_72, %c0_73], %245 {strides = array<i32>} : memref<64x32xf32, #tpu.memory_space<vmem>>, vector<8x32xf32>,
    %247 = vector.extract_strided_slice %244 {offsets = [0, 32], sizes = [8, 32], strides = [1, 1]} : vector<8x64xf32> to vector<8x32xf32>
    %c8_74 = arith.constant 8 : index
    %c0_75 = arith.constant 0 : index
    %248 = vector.load %arg13[%c8_74, %c0_75] : memref<64x32xf32, #tpu.memory_space<vmem>>, vector<8x32xf32>
    tpu.vector_store %arg13[%c8_74, %c0_75], %247 {strides = array<i32>} : memref<64x32xf32, #tpu.memory_space<vmem>>, vector<8x32xf32>,
    %c56_76 = arith.constant 56 : index
    %c0_77 = arith.constant 0 : index
    %249 = vector.load %arg11[%c56_76, %c0_77] : memref<64x192xf32, #tpu.memory_space<vmem>>, vector<8x192xf32>
    %cst_78 = arith.constant dense<0.000000e+00> : vector<8x192xf32>
    %250 = tpu.matmul %244, %8, %cst_78 {dimension_numbers = #tpu.dot_dimension_numbers<[1], [0], [0], [1], [0, 0, 1, 1], [], []>} : vector<8x64xf32>, vector<64x192xf32>, vector<8x192xf32> -> vector<8x192xf32>
    %251 = vector.extract_strided_slice %249 {offsets = [0, 0], sizes = [8, 64], strides = [1, 1]} : vector<8x192xf32> to vector<8x64xf32>
    %252 = vector.extract_strided_slice %250 {offsets = [0, 0], sizes = [8, 64], strides = [1, 1]} : vector<8x192xf32> to vector<8x64xf32>
    %253 = arith.addf %251, %252 : vector<8x64xf32>
    %254 = arith.negf %253 : vector<8x64xf32>
    %255 = math.exp %254 : vector<8x64xf32>
    %cst_79 = arith.constant 1.000000e+00 : f32
    %256 = vector.broadcast %cst_79 : f32 to vector<8x64xf32>
    %257 = arith.addf %256, %255 : vector<8x64xf32>
    %258 = arith.divf %256, %257 : vector<8x64xf32>
    %259 = vector.extract_strided_slice %249 {offsets = [0, 64], sizes = [8, 64], strides = [1, 1]} : vector<8x192xf32> to vector<8x64xf32>
    %260 = vector.extract_strided_slice %250 {offsets = [0, 64], sizes = [8, 64], strides = [1, 1]} : vector<8x192xf32> to vector<8x64xf32>
    %261 = arith.addf %259, %260 : vector<8x64xf32>
    %262 = arith.negf %261 : vector<8x64xf32>
    %263 = math.exp %262 : vector<8x64xf32>
    %cst_80 = arith.constant 1.000000e+00 : f32
    %264 = vector.broadcast %cst_80 : f32 to vector<8x64xf32>
    %265 = arith.addf %264, %263 : vector<8x64xf32>
    %266 = arith.divf %264, %265 : vector<8x64xf32>
    %267 = vector.extract_strided_slice %249 {offsets = [0, 128], sizes = [8, 64], strides = [1, 1]} : vector<8x192xf32> to vector<8x64xf32>
    %268 = vector.extract_strided_slice %250 {offsets = [0, 128], sizes = [8, 64], strides = [1, 1]} : vector<8x192xf32> to vector<8x64xf32>
    %269 = vector.broadcast %9 : vector<1x64xf32> to vector<8x64xf32>
    %270 = arith.addf %268, %269 : vector<8x64xf32>
    %271 = arith.mulf %258, %270 : vector<8x64xf32>
    %272 = arith.addf %267, %271 : vector<8x64xf32>
    %273 = math.tanh %272 : vector<8x64xf32>
    %cst_81 = arith.constant 1.000000e+00 : f32
    %274 = vector.broadcast %cst_81 : f32 to vector<8x64xf32>
    %275 = arith.subf %274, %266 : vector<8x64xf32>
    %276 = arith.mulf %275, %273 : vector<8x64xf32>
    %277 = arith.mulf %266, %244 : vector<8x64xf32>
    %278 = arith.addf %276, %277 : vector<8x64xf32>
    %279 = vector.extract_strided_slice %278 {offsets = [0, 0], sizes = [8, 32], strides = [1, 1]} : vector<8x64xf32> to vector<8x32xf32>
    %c56_82 = arith.constant 56 : index
    %c0_83 = arith.constant 0 : index
    %280 = vector.load %arg12[%c56_82, %c0_83] : memref<64x32xf32, #tpu.memory_space<vmem>>, vector<8x32xf32>
    tpu.vector_store %arg12[%c56_82, %c0_83], %279 {strides = array<i32>} : memref<64x32xf32, #tpu.memory_space<vmem>>, vector<8x32xf32>,
    %281 = vector.extract_strided_slice %278 {offsets = [0, 32], sizes = [8, 32], strides = [1, 1]} : vector<8x64xf32> to vector<8x32xf32>
    %c0_84 = arith.constant 0 : index
    %c0_85 = arith.constant 0 : index
    %282 = vector.load %arg13[%c0_84, %c0_85] : memref<64x32xf32, #tpu.memory_space<vmem>>, vector<8x32xf32>
    tpu.vector_store %arg13[%c0_84, %c0_85], %281 {strides = array<i32>} : memref<64x32xf32, #tpu.memory_space<vmem>>, vector<8x32xf32>,
    %c0_86 = arith.constant 0 : index
    %c0_87 = arith.constant 0 : index
    %283 = vector.load %arg12[%c0_86, %c0_87] : memref<64x32xf32, #tpu.memory_space<vmem>>, vector<64x32xf32>
    %c0_88 = arith.constant 0 : index
    %c0_89 = arith.constant 0 : index
    %284 = vector.load %arg13[%c0_88, %c0_89] : memref<64x32xf32, #tpu.memory_space<vmem>>, vector<64x32xf32>
    %c0_90 = arith.constant 0 : index
    %c0_91 = arith.constant 0 : index
    %285 = vector.load %arg5[%c0_90, %c0_91] : memref<64x64xf32, #tpu.memory_space<vmem>>, vector<32x64xf32>
    %cst_92 = arith.constant dense<0.000000e+00> : vector<64x64xf32>
    %286 = tpu.matmul %283, %285, %cst_92 {dimension_numbers = #tpu.dot_dimension_numbers<[1], [0], [0], [1], [0, 0, 1, 1], [], []>} : vector<64x32xf32>, vector<32x64xf32>, vector<64x64xf32> -> vector<64x64xf32>
    %c32_93 = arith.constant 32 : index
    %c0_94 = arith.constant 0 : index
    %287 = vector.load %arg5[%c32_93, %c0_94] : memref<64x64xf32, #tpu.memory_space<vmem>>, vector<32x64xf32>
    %cst_95 = arith.constant dense<0.000000e+00> : vector<64x64xf32>
    %288 = tpu.matmul %284, %287, %cst_95 {dimension_numbers = #tpu.dot_dimension_numbers<[1], [0], [0], [1], [0, 0, 1, 1], [], []>} : vector<64x32xf32>, vector<32x64xf32>, vector<64x64xf32> -> vector<64x64xf32>
    %289 = arith.addf %286, %288 : vector<64x64xf32>
    %c0_96 = arith.constant 0 : index
    %c0_97 = arith.constant 0 : index
    %290 = vector.load %arg6[%c0_96, %c0_97] : memref<1x64xf32, #tpu.memory_space<vmem>>, vector<1x64xf32>
    %291 = vector.broadcast %290 : vector<1x64xf32> to vector<64x64xf32>
    %292 = arith.addf %289, %291 : vector<64x64xf32>
    %293 = math.tanh %292 : vector<64x64xf32>
    %c0_98 = arith.constant 0 : index
    %c0_99 = arith.constant 0 : index
    %294 = vector.load %arg7[%c0_98, %c0_99] : memref<1x64xf32, #tpu.memory_space<vmem>>, vector<1x64xf32>
    %295 = vector.broadcast %294 : vector<1x64xf32> to vector<64x64xf32>
    %296 = arith.mulf %293, %295 : vector<64x64xf32>
    %cst_100 = arith.constant dense<0.000000e+00> : vector<64xf32>
    %297 = vector.multi_reduction <add>, %296, %cst_100 [1] : vector<64x64xf32> to vector<64xf32>
    %298 = vector.shape_cast %297 : vector<64xf32> to vector<64x1xf32>
    %299 = vector.shape_cast %298 : vector<64x1xf32> to vector<8x8x1xf32>
    %cst_101 = arith.constant dense<0xFF800000> : vector<8x1xf32>
    %300 = vector.multi_reduction <maximumf>, %299, %cst_101 [0] : vector<8x8x1xf32> to vector<8x1xf32>
    %301 = vector.shape_cast %300 : vector<8x1xf32> to vector<1x8x1xf32>
    %302 = vector.broadcast %301 : vector<1x8x1xf32> to vector<8x8x1xf32>
    %303 = arith.subf %299, %302 : vector<8x8x1xf32>
    %304 = math.exp %303 : vector<8x8x1xf32>
    %cst_102 = arith.constant dense<0.000000e+00> : vector<8x1xf32>
    %305 = vector.multi_reduction <add>, %304, %cst_102 [0] : vector<8x8x1xf32> to vector<8x1xf32>
    %306 = vector.shape_cast %305 : vector<8x1xf32> to vector<1x8x1xf32>
    %307 = tpu.reciprocal %306 {approx = true} : vector<1x8x1xf32> -> vector<1x8x1xf32>
    %308 = vector.broadcast %307 : vector<1x8x1xf32> to vector<8x8x1xf32>
    %309 = arith.mulf %304, %308 : vector<8x8x1xf32>
    %310 = vector.shape_cast %283 : vector<64x32xf32> to vector<8x8x32xf32>
    %311 = vector.broadcast %309 : vector<8x8x1xf32> to vector<8x8x32xf32>
    %312 = arith.mulf %310, %311 : vector<8x8x32xf32>
    %cst_103 = arith.constant dense<0.000000e+00> : vector<8x32xf32>
    %313 = vector.multi_reduction <add>, %312, %cst_103 [0] : vector<8x8x32xf32> to vector<8x32xf32>
    %314 = vector.shape_cast %284 : vector<64x32xf32> to vector<8x8x32xf32>
    %315 = vector.broadcast %309 : vector<8x8x1xf32> to vector<8x8x32xf32>
    %316 = arith.mulf %314, %315 : vector<8x8x32xf32>
    %cst_104 = arith.constant dense<0.000000e+00> : vector<8x32xf32>
    %317 = vector.multi_reduction <add>, %316, %cst_104 [0] : vector<8x8x32xf32> to vector<8x32xf32>
    %c0_105 = arith.constant 0 : index
    %c0_106 = arith.constant 0 : index
    %318 = vector.load %arg8[%c0_105, %c0_106] : memref<64x4xf32, #tpu.memory_space<vmem>>, vector<32x4xf32>
    %cst_107 = arith.constant dense<0.000000e+00> : vector<8x4xf32>
    %319 = tpu.matmul %313, %318, %cst_107 {dimension_numbers = #tpu.dot_dimension_numbers<[1], [0], [0], [1], [0, 0, 1, 1], [], []>} : vector<8x32xf32>, vector<32x4xf32>, vector<8x4xf32> -> vector<8x4xf32>
    %c32_108 = arith.constant 32 : index
    %c0_109 = arith.constant 0 : index
    %320 = vector.load %arg8[%c32_108, %c0_109] : memref<64x4xf32, #tpu.memory_space<vmem>>, vector<32x4xf32>
    %cst_110 = arith.constant dense<0.000000e+00> : vector<8x4xf32>
    %321 = tpu.matmul %317, %320, %cst_110 {dimension_numbers = #tpu.dot_dimension_numbers<[1], [0], [0], [1], [0, 0, 1, 1], [], []>} : vector<8x32xf32>, vector<32x4xf32>, vector<8x4xf32> -> vector<8x4xf32>
    %322 = arith.addf %319, %321 : vector<8x4xf32>
    %c0_111 = arith.constant 0 : index
    %c0_112 = arith.constant 0 : index
    %323 = vector.load %arg9[%c0_111, %c0_112] : memref<1x4xf32, #tpu.memory_space<vmem>>, vector<1x4xf32>
    %324 = vector.broadcast %323 : vector<1x4xf32> to vector<8x4xf32>
    %325 = arith.addf %322, %324 : vector<8x4xf32>
    %c0_113 = arith.constant 0 : index
    %c0_114 = arith.constant 0 : index
    %326 = vector.load %arg10[%c0_113, %c0_114] : memref<8x4xf32, #tpu.memory_space<vmem>>, vector<8x4xf32>
    tpu.vector_store %arg10[%c0_113, %c0_114], %325 {strides = array<i32>} : memref<8x4xf32, #tpu.memory_space<vmem>>, vector<8x4xf32>,
    return
  }
}

</mosaic_0001>

<llo_original>
// kernel: tpu_custom_call.1
$region0: #{tpu_custom_call.1}
  #allocation0 [shape = 'u32[]', space=smem, size = 0x4, offset = 0x4, fixed_abs, tag = 'smem constant byte address 0x4 - core index']
  #allocation1 [shape = 'u32[144,128]{1,0:T(1,128)}', space=vmem, size = 0x12000, scoped, tag = 'internal scratch']
  #allocation2 [shape = 'f32[64,192]{1,0:T(8,128)}', space=vmem, size = 0x10000, scoped, tag = 'scratch operand']
  #allocation3 [shape = 'f32[64,32]{1,0:T(8,128)}', space=vmem, size = 0x8000, scoped, tag = 'scratch operand']
  #allocation4 [shape = 'f32[64,32]{1,0:T(8,128)}', space=vmem, size = 0x8000, scoped, tag = 'scratch operand']
  %s0 = inlined_call_operand.vmem [shape: f32[8,8,64], index: 0, kind: input, shape index: {}]
  %s1 = inlined_call_operand.hbm [shape: f32[64,192], index: 1, kind: input, shape index: {}]
  %s2 = inlined_call_operand.vmem [shape: f32[1,192], index: 2, kind: input, shape index: {}]
  %s3 = inlined_call_operand.hbm [shape: f32[64,192], index: 3, kind: input, shape index: {}]
  %s4 = inlined_call_operand.vmem [shape: f32[1,64], index: 4, kind: input, shape index: {}]
  %s5 = inlined_call_operand.hbm [shape: f32[64,64], index: 5, kind: input, shape index: {}]
  %s6 = inlined_call_operand.vmem [shape: f32[1,64], index: 6, kind: input, shape index: {}]
  %s7 = inlined_call_operand.vmem [shape: f32[1,64], index: 7, kind: input, shape index: {}]
  %s8 = inlined_call_operand.vmem [shape: f32[64,4], index: 8, kind: input, shape index: {}]
  %s9 = inlined_call_operand.vmem [shape: f32[1,4], index: 9, kind: input, shape index: {}]
  %s10 = inlined_call_operand.vmem [shape: f32[8,4], index: 10, kind: output, shape index: {}]
  %s11 = sld [smem:[#allocation0]]
  $region62: #{tpu_custom_call.1} parent=0
    _
  %s13 = ssub.s32 1, %s11
  %s14 = scalar_select 0, %s13, %s11
  $region1: #{tpu_custom_call.1} parent=0
    #allocation5 [shape = 'u8[65536]{0}', space=vmem, size = 0x10000, scoped, tag = 'input window, operand 1, single buffered']
    #allocation6 [shape = 's32[1]{0}', space=sflag, size = 0x4, scoped, tag = 'scoped memory for tpu_custom_call.1']
    #allocation7 [shape = 'u8[65536]{0}', space=vmem, size = 0x10000, scoped, tag = 'input window, operand 3, single buffered']
    #allocation8 [shape = 's32[1]{0}', space=sflag, size = 0x4, scoped, tag = 'scoped memory for tpu_custom_call.1']
    #allocation9 [shape = 'u8[32768]{0}', space=vmem, size = 0x8000, scoped, tag = 'input window, operand 5, single buffered']
    %15 = vsyncpa [#allocation6], 0
    %16 = vsyncpa [#allocation8], 0
    // Predicated region
    $region2: #{tpu_custom_call.1} parent=1 // pred_check
      _
    $region3: #{tpu_custom_call.1} parent=1 // pred_check_branch
      %18 = sbr.rel (0) target = $region5
    $region4: #{tpu_custom_call.1} parent=1 // pred_region
      _
    $region5: #{tpu_custom_call.1} parent=1 // pred_fallthru
      _
    // Predicated region
    $region6: #{tpu_custom_call.1} parent=1 // pred_check
      _
    $region7: #{tpu_custom_call.1} parent=1 // pred_check_branch
      %20 = sbr.rel (0) target = $region9
    $region8: #{tpu_custom_call.1} parent=1 // pred_region
      %s22 = ssub.s32 2048, 2048
      %23 = vsyncadd [#allocation6], %s22
      %s24 = sshll.u32 [#allocation5], 4
      %s25 = int_to_ptr.vmem [resolvable:$true] %s24
      %30 = dma.hbm_to_vmem [thread:$0]  %s1, 2048, %s25, [#allocation6], 256, 256, 16
    $region9: #{tpu_custom_call.1} parent=1 // pred_fallthru
      _
    // Predicated region
    $region10: #{tpu_custom_call.1} parent=1 // pred_check
      _
    $region11: #{tpu_custom_call.1} parent=1 // pred_check_branch
      %32 = sbr.rel (0) target = $region13
    $region12: #{tpu_custom_call.1} parent=1 // pred_region
      _
    $region13: #{tpu_custom_call.1} parent=1 // pred_fallthru
      _
    // Predicated region
    $region14: #{tpu_custom_call.1} parent=1 // pred_check
      _
    $region15: #{tpu_custom_call.1} parent=1 // pred_check_branch
      %34 = sbr.rel (0) target = $region17
    $region16: #{tpu_custom_call.1} parent=1 // pred_region
      %s36 = ssub.s32 2048, 2048
      %37 = vsyncadd [#allocation8], %s36
      %s38 = sshll.u32 [#allocation7], 4
      %s39 = int_to_ptr.vmem [resolvable:$true] %s38
      %44 = dma.hbm_to_vmem [thread:$0]  %s3, 2048, %s39, [#allocation8], 256, 256, 16
    $region17: #{tpu_custom_call.1} parent=1 // pred_fallthru
      _
    // Predicated region
    $region18: #{tpu_custom_call.1} parent=1 // pred_check
      _
    $region19: #{tpu_custom_call.1} parent=1 // pred_check_branch
      %46 = sbr.rel (0) target = $region21
    $region20: #{tpu_custom_call.1} parent=1 // pred_region
      _
    $region21: #{tpu_custom_call.1} parent=1 // pred_fallthru
      _
    // Predicated region
    $region22: #{tpu_custom_call.1} parent=1 // pred_check
      _
    $region23: #{tpu_custom_call.1} parent=1 // pred_check_branch
      %48 = sbr.rel (0) target = $region25
    $region24: #{tpu_custom_call.1} parent=1 // pred_region
      %s50 = ssub.s32 1024, 1024
      %51 = vsyncadd [#allocation8], %s50
      %s52 = sshll.u32 [#allocation9], 4
      %s53 = int_to_ptr.vmem [resolvable:$true] %s52
      %58 = dma.hbm_to_vmem [thread:$0]  %s5, 1024, %s53, [#allocation8], 128, 128, 8
    $region25: #{tpu_custom_call.1} parent=1 // pred_fallthru
      _
    // Predicated region
    $region26: #{tpu_custom_call.1} parent=1 // pred_check
      _
    $region27: #{tpu_custom_call.1} parent=1 // pred_check_branch
      %60 = sbr.rel (0) target = $region29
    $region28: #{tpu_custom_call.1} parent=1 // pred_region
      _
    $region29: #{tpu_custom_call.1} parent=1 // pred_fallthru
      _
    // Predicated region
    $region30: #{tpu_custom_call.1} parent=1 // pred_check
      _
    $region31: #{tpu_custom_call.1} parent=1 // pred_check_branch
      %62 = sbr.rel (0) target = $region33
    $region32: #{tpu_custom_call.1} parent=1 // pred_region
      _
    $region33: #{tpu_custom_call.1} parent=1 // pred_fallthru
      _
    // Predicated region
    $region34: #{tpu_custom_call.1} parent=1 // pred_check
      _
    $region35: #{tpu_custom_call.1} parent=1 // pred_check_branch
      %64 = sbr.rel (0) target = $region37
    $region36: #{tpu_custom_call.1} parent=1 // pred_region
      _
    $region37: #{tpu_custom_call.1} parent=1 // pred_fallthru
      _
    // Predicated region
    $region38: #{tpu_custom_call.1} parent=1 // pred_check
      _
    $region39: #{tpu_custom_call.1} parent=1 // pred_check_branch
      %66 = sbr.rel (0) target = $region41
    $region40: #{tpu_custom_call.1} parent=1 // pred_region
      _
    $region41: #{tpu_custom_call.1} parent=1 // pred_fallthru
      _
    // Predicated region
    $region42: #{tpu_custom_call.1} parent=1 // pred_check
      _
    $region43: #{tpu_custom_call.1} parent=1 // pred_check_branch
      %68 = sbr.rel (0) target = $region45
    $region44: #{tpu_custom_call.1} parent=1 // pred_region
      %69 = dma.done [#allocation6], 2048
    $region45: #{tpu_custom_call.1} parent=1 // pred_fallthru
      _
    // Predicated region
    $region46: #{tpu_custom_call.1} parent=1 // pred_check
      _
    $region47: #{tpu_custom_call.1} parent=1 // pred_check_branch
      %71 = sbr.rel (0) target = $region49
    $region48: #{tpu_custom_call.1} parent=1 // pred_region
      %72 = dma.done [#allocation8], 2048
    $region49: #{tpu_custom_call.1} parent=1 // pred_fallthru
      _
    // Predicated region
    $region50: #{tpu_custom_call.1} parent=1 // pred_check
      _
    $region51: #{tpu_custom_call.1} parent=1 // pred_check_branch
      %74 = sbr.rel (0) target = $region53
    $region52: #{tpu_custom_call.1} parent=1 // pred_region
      %75 = dma.done [#allocation8], 1024
    $region53: #{tpu_custom_call.1} parent=1 // pred_fallthru
      _
    %v76 = vld [vmem:[%s0] sm:$0xff]
    %v77 = vld [vmem:[%s0 + $0x8] sm:$0xff]
    %v78 = vld [vmem:[%s0 + $0x10] sm:$0xff]
    %v79 = vld [vmem:[%s0 + $0x18] sm:$0xff]
    %v80 = vld [vmem:[%s0 + $0x20] sm:$0xff]
    %v81 = vld [vmem:[%s0 + $0x28] sm:$0xff]
    %v82 = vld [vmem:[%s0 + $0x30] sm:$0xff]
    %v83 = vld [vmem:[%s0 + $0x38] sm:$0xff]
    %v84 = vld [vmem:[#allocation5] sm:$0xff]
    %v85 = vld [vmem:[#allocation5 + $0x8] sm:$0xff]
    %v86 = vld [vmem:[#allocation5 + $0x10] sm:$0xff]
    %v87 = vld [vmem:[#allocation5 + $0x18] sm:$0xff]
    %v88 = vld [vmem:[#allocation5 + $0x20] sm:$0xff]
    %v89 = vld [vmem:[#allocation5 + $0x28] sm:$0xff]
    %v90 = vld [vmem:[#allocation5 + $0x30] sm:$0xff]
    %v91 = vld [vmem:[#allocation5 + $0x38] sm:$0xff]
    %v92 = vld [vmem:[#allocation5 + $0x40] sm:$0xff]
    %v93 = vld [vmem:[#allocation5 + $0x48] sm:$0xff]
    %v94 = vld [vmem:[#allocation5 + $0x50] sm:$0xff]
    %v95 = vld [vmem:[#allocation5 + $0x58] sm:$0xff]
    %v96 = vld [vmem:[#allocation5 + $0x60] sm:$0xff]
    %v97 = vld [vmem:[#allocation5 + $0x68] sm:$0xff]
    %v98 = vld [vmem:[#allocation5 + $0x70] sm:$0xff]
    %v99 = vld [vmem:[#allocation5 + $0x78] sm:$0xff]
    %v100 = vld [vmem:[%s2] sm:$0x3]
    %v102 = vlaneseq
    %v103 = vshrl.u32 %v102, 7
    %v104 = vsub.s32 0, %v103
    %v105 = vrot.slane %v100, %v104
    %v106 = vlaneseq
    %v107 = vshrl.u32 %v106, 7
    %v108 = vsub.s32 1, %v107
    %v109 = vrot.slane %v100, %v108
    %vm112 = vcmask 523264
    %v114 = vsel %vm112, %v76, 0
    %v117 = vsel %vm112, %v77, 0
    %v120 = vsel %vm112, %v78, 0
    %v123 = vsel %vm112, %v79, 0
    %v126 = vsel %vm112, %v80, 0
    %v129 = vsel %vm112, %v81, 0
    %v132 = vsel %vm112, %v82, 0
    %v135 = vsel %vm112, %v83, 0
    %137 = vmatprep.subr.mxu0 %v85
    %138 = vmatpush1.msra.mxu0 %v84
    %139 = vmatprep.subr.mxu0 %v87
    %140 = vmatpush1.msra.mxu0 %v86
    %141 = vmatprep.subr.mxu0 %v89
    %142 = vmatpush1.msra.mxu0 %v88
    %143 = vmatprep.subr.mxu0 %v91
    %144 = vmatpush1.msra.mxu0 %v90
    %145 = vmatprep.subr.mxu0 %v93
    %146 = vmatpush1.msra.mxu0 %v92
    %147 = vmatprep.subr.mxu0 %v95
    %148 = vmatpush1.msra.mxu0 %v94
    %149 = vmatprep.subr.mxu0 %v97
    %150 = vmatpush1.msra.mxu0 %v96
    %151 = vmatprep.subr.mxu0 %v99
    %152 = vmatpush1.msra.mxu0 %v98
    %153 = vmatprep.subr.mxu0 0.0
    %154 = vmatpush1.msra.mxu0 0.0
    %155 = vmatprep.subr.mxu0 0.0
    %156 = vmatpush1.msra.mxu0 0.0
    %157 = vmatprep.subr.mxu0 0.0
    %158 = vmatpush1.msra.mxu0 0.0
    %159 = vmatprep.subr.mxu0 0.0
    %160 = vmatpush1.msra.mxu0 0.0
    %161 = vmatprep.subr.mxu0 0.0
    %162 = vmatpush1.msra.mxu0 0.0
    %163 = vmatprep.subr.mxu0 0.0
    %164 = vmatpush1.msra.mxu0 0.0
    %165 = vmatprep.subr.mxu0 0.0
    %166 = vmatpush1.msra.mxu0 0.0
    %167 = vmatprep.subr.mxu0 0.0
    %168 = vmatpush1.msra.mxu0 0.0
    %169 = vmatprep.subr.mxu0 0.0
    %170 = vmatpush1.msra.mxu0 0.0
    %171 = vmatprep.subr.mxu0 0.0
    %172 = vmatpush1.msra.mxu0 0.0
    %173 = vmatprep.subr.mxu0 0.0
    %174 = vmatpush1.msra.mxu0 0.0
    %175 = vmatprep.subr.mxu0 0.0
    %176 = vmatpush1.msra.mxu0 0.0
    %177 = vmatprep.subr.mxu0 0.0
    %178 = vmatpush1.msra.mxu0 0.0
    %179 = vmatprep.subr.mxu0 0.0
    %180 = vmatpush1.msra.mxu0 0.0
    %181 = vmatprep.subr.mxu0 0.0
    %182 = vmatpush1.msra.mxu0 0.0
    %183 = vmatprep.subr.mxu0 0.0
    %184 = vmatpush1.msra.mxu0 0.0
    %185 = vmatprep.subr.mxu0 0.0
    %186 = vmatpush1.msra.mxu0 0.0
    %187 = vmatprep.subr.mxu0 0.0
    %188 = vmatpush1.msra.mxu0 0.0
    %189 = vmatprep.subr.mxu0 0.0
    %190 = vmatpush1.msra.mxu0 0.0
    %191 = vmatprep.subr.mxu0 0.0
    %192 = vmatpush1.msra.mxu0 0.0
    %193 = vmatprep.subr.mxu0 0.0
    %194 = vmatpush1.msra.mxu0 0.0
    %195 = vmatprep.subr.mxu0 0.0
    %196 = vmatpush1.msra.mxu0 0.0
    %197 = vmatprep.subr.mxu0 0.0
    %198 = vmatpush1.msra.mxu0 0.0
    %199 = vmatprep.subr.mxu0 0.0
    %200 = vmatpush1.msra.mxu0 0.0
    %201 = vmatprep.mubr.f32.mxu0 0.0
    %202 = vmatmul.mubr.f32.gmra.mrb[0].mxu0 %v114
    %v203 = vpop.f32.mrb[0].mxu0
    %v204 = vadd.f32 %v105, %v203
    %v205 = vpop.f32.mrb[0].mxu0
    %v206 = vadd.f32 %v109, %v205
    %207 = vmatprep.mubr.f32.mxu0 0.0
    %208 = vmatmul.mubr.f32.gmra.mrb[0].mxu0 %v117
    %v209 = vpop.f32.mrb[0].mxu0
    %v210 = vadd.f32 %v105, %v209
    %v211 = vpop.f32.mrb[0].mxu0
    %v212 = vadd.f32 %v109, %v211
    %213 = vmatprep.mubr.f32.mxu0 0.0
    %214 = vmatmul.mubr.f32.gmra.mrb[0].mxu0 %v120
    %v215 = vpop.f32.mrb[0].mxu0
    %v216 = vadd.f32 %v105, %v215
    %v217 = vpop.f32.mrb[0].mxu0
    %v218 = vadd.f32 %v109, %v217
    %219 = vmatprep.mubr.f32.mxu0 0.0
    %220 = vmatmul.mubr.f32.gmra.mrb[0].mxu0 %v123
    %v221 = vpop.f32.mrb[0].mxu0
    %v222 = vadd.f32 %v105, %v221
    %v223 = vpop.f32.mrb[0].mxu0
    %v224 = vadd.f32 %v109, %v223
    %225 = vmatprep.mubr.f32.mxu0 0.0
    %226 = vmatmul.mubr.f32.gmra.mrb[0].mxu0 %v126
    %v227 = vpop.f32.mrb[0].mxu0
    %v228 = vadd.f32 %v105, %v227
    %v229 = vpop.f32.mrb[0].mxu0
    %v230 = vadd.f32 %v109, %v229
    %231 = vmatprep.mubr.f32.mxu0 0.0
    %232 = vmatmul.mubr.f32.gmra.mrb[0].mxu0 %v129
    %v233 = vpop.f32.mrb[0].mxu0
    %v234 = vadd.f32 %v105, %v233
    %v235 = vpop.f32.mrb[0].mxu0
    %v236 = vadd.f32 %v109, %v235
    %237 = vmatprep.mubr.f32.mxu0 0.0
    %238 = vmatmul.mubr.f32.gmra.mrb[0].mxu0 %v132
    %v239 = vpop.f32.mrb[0].mxu0
    %v240 = vadd.f32 %v105, %v239
    %v241 = vpop.f32.mrb[0].mxu0
    %v242 = vadd.f32 %v109, %v241
    %243 = vmatprep.mubr.f32.mxu0 0.0
    %244 = vmatmul.mubr.f32.gmra.mrb[0].mxu0 %v135
    %v245 = vpop.f32.mrb[0].mxu0
    %v246 = vadd.f32 %v105, %v245
    %v247 = vpop.f32.mrb[0].mxu0
    %v248 = vadd.f32 %v109, %v247
    %249 = vdwg.mxu0
    %250 = vst [vmem:[#allocation2] sm:$0xff] %v204
    %251 = vst.msk [vmem:[#allocation2 + $0x8] sm:$0xff] %vm112, %v206
    %252 = vst [vmem:[#allocation2 + $0x10] sm:$0xff] %v210
    %253 = vst.msk [vmem:[#allocation2 + $0x18] sm:$0xff] %vm112, %v212
    %254 = vst [vmem:[#allocation2 + $0x20] sm:$0xff] %v216
    %255 = vst.msk [vmem:[#allocation2 + $0x28] sm:$0xff] %vm112, %v218
    %256 = vst [vmem:[#allocation2 + $0x30] sm:$0xff] %v222
    %257 = vst.msk [vmem:[#allocation2 + $0x38] sm:$0xff] %vm112, %v224
    %258 = vst [vmem:[#allocation2 + $0x40] sm:$0xff] %v228
    %259 = vst.msk [vmem:[#allocation2 + $0x48] sm:$0xff] %vm112, %v230
    %260 = vst [vmem:[#allocation2 + $0x50] sm:$0xff] %v234
    %261 = vst.msk [vmem:[#allocation2 + $0x58] sm:$0xff] %vm112, %v236
    %262 = vst [vmem:[#allocation2 + $0x60] sm:$0xff] %v240
    %263 = vst.msk [vmem:[#allocation2 + $0x68] sm:$0xff] %vm112, %v242
    %264 = vst [vmem:[#allocation2 + $0x70] sm:$0xff] %v246
    %265 = vst.msk [vmem:[#allocation2 + $0x78] sm:$0xff] %vm112, %v248
    %v266 = vld [vmem:[#allocation7] sm:$0xff]
    %v267 = vld [vmem:[#allocation7 + $0x8] sm:$0xff]
    %v268 = vld [vmem:[#allocation7 + $0x10] sm:$0xff]
    %v269 = vld [vmem:[#allocation7 + $0x18] sm:$0xff]
    %v270 = vld [vmem:[#allocation7 + $0x20] sm:$0xff]
    %v271 = vld [vmem:[#allocation7 + $0x28] sm:$0xff]
    %v272 = vld [vmem:[#allocation7 + $0x30] sm:$0xff]
    %v273 = vld [vmem:[#allocation7 + $0x38] sm:$0xff]
    %v274 = vld [vmem:[#allocation7 + $0x40] sm:$0xff]
    %v275 = vld [vmem:[#allocation7 + $0x48] sm:$0xff]
    %v276 = vld [vmem:[#allocation7 + $0x50] sm:$0xff]
    %v277 = vld [vmem:[#allocation7 + $0x58] sm:$0xff]
    %v278 = vld [vmem:[#allocation7 + $0x60] sm:$0xff]
    %v279 = vld [vmem:[#allocation7 + $0x68] sm:$0xff]
    %v280 = vld [vmem:[#allocation7 + $0x70] sm:$0xff]
    %v281 = vld [vmem:[#allocation7 + $0x78] sm:$0xff]
    %v282 = vld [vmem:[%s4] sm:$0x1]
    %v283 = vld [vmem:[#allocation2] sm:$0xff]
    %v284 = vld [vmem:[#allocation2 + $0x8] sm:$0xff]
    %v286 = vsel %vm112, 0.0, 0
    %288 = vmatprep.subr.mxu0 %v267
    %289 = vmatpush1.msra.mxu0 %v266
    %290 = vmatprep.subr.mxu0 %v269
    %291 = vmatpush1.msra.mxu0 %v268
    %292 = vmatprep.subr.mxu0 %v271
    %293 = vmatpush1.msra.mxu0 %v270
    %294 = vmatprep.subr.mxu0 %v273
    %295 = vmatpush1.msra.mxu0 %v272
    %296 = vmatprep.subr.mxu0 %v275
    %297 = vmatpush1.msra.mxu0 %v274
    %298 = vmatprep.subr.mxu0 %v277
    %299 = vmatpush1.msra.mxu0 %v276
    %300 = vmatprep.subr.mxu0 %v279
    %301 = vmatpush1.msra.mxu0 %v278
    %302 = vmatprep.subr.mxu0 %v281
    %303 = vmatpush1.msra.mxu0 %v280
    %304 = vmatprep.subr.mxu0 0.0
    %305 = vmatpush1.msra.mxu0 0.0
    %306 = vmatprep.subr.mxu0 0.0
    %307 = vmatpush1.msra.mxu0 0.0
    %308 = vmatprep.subr.mxu0 0.0
    %309 = vmatpush1.msra.mxu0 0.0
    %310 = vmatprep.subr.mxu0 0.0
    %311 = vmatpush1.msra.mxu0 0.0
    %312 = vmatprep.subr.mxu0 0.0
    %313 = vmatpush1.msra.mxu0 0.0
    %314 = vmatprep.subr.mxu0 0.0
    %315 = vmatpush1.msra.mxu0 0.0
    %316 = vmatprep.subr.mxu0 0.0
    %317 = vmatpush1.msra.mxu0 0.0
    %318 = vmatprep.subr.mxu0 0.0
    %319 = vmatpush1.msra.mxu0 0.0
    %320 = vmatprep.subr.mxu0 0.0
    %321 = vmatpush1.msra.mxu0 0.0
    %322 = vmatprep.subr.mxu0 0.0
    %323 = vmatpush1.msra.mxu0 0.0
    %324 = vmatprep.subr.mxu0 0.0
    %325 = vmatpush1.msra.mxu0 0.0
    %326 = vmatprep.subr.mxu0 0.0
    %327 = vmatpush1.msra.mxu0 0.0
    %328 = vmatprep.subr.mxu0 0.0
    %329 = vmatpush1.msra.mxu0 0.0
    %330 = vmatprep.subr.mxu0 0.0
    %331 = vmatpush1.msra.mxu0 0.0
    %332 = vmatprep.subr.mxu0 0.0
    %333 = vmatpush1.msra.mxu0 0.0
    %334 = vmatprep.subr.mxu0 0.0
    %335 = vmatpush1.msra.mxu0 0.0
    %336 = vmatprep.subr.mxu0 0.0
    %337 = vmatpush1.msra.mxu0 0.0
    %338 = vmatprep.subr.mxu0 0.0
    %339 = vmatpush1.msra.mxu0 0.0
    %340 = vmatprep.subr.mxu0 0.0
    %341 = vmatpush1.msra.mxu0 0.0
    %342 = vmatprep.subr.mxu0 0.0
    %343 = vmatpush1.msra.mxu0 0.0
    %344 = vmatprep.subr.mxu0 0.0
    %345 = vmatpush1.msra.mxu0 0.0
    %346 = vmatprep.subr.mxu0 0.0
    %347 = vmatpush1.msra.mxu0 0.0
    %348 = vmatprep.subr.mxu0 0.0
    %349 = vmatpush1.msra.mxu0 0.0
    %350 = vmatprep.subr.mxu0 0.0
    %351 = vmatpush1.msra.mxu0 0.0
    %352 = vmatprep.mubr.f32.mxu0 0.0
    %353 = vmatmul.mubr.f32.gmra.mrb[0].mxu0 %v286
    %v354 = vpop.f32.mrb[0].mxu0
    %v355 = vadd.f32 0.0, %v354
    %v356 = vpop.f32.mrb[0].mxu0
    %v357 = vadd.f32 0.0, %v356
    %358 = vdwg.mxu0
    %v359 = vadd.f32 %v283, %v355
    %v360 = vxor.u32 %v359, 2147483648
    %v361 = vmul.f32 %v360, 1.442695
    %v362 = vpow.pop %v361
    %v363 = vadd.f32 %v362, 1.0
    %v364 = vrcp.pop %v363
    %v365 = vmul.f32 1.0, %v364
    %v367 = vlaneseq
    %v368 = vshrl.u32 %v367, 7
    %v369 = vsub.s32 0, %v368
    %v370 = vrot.slane %v282, %v369
    %v372 = vadd.f32 %v357, %v370
    %v373 = vmul.f32 %v365, %v372
    %v374 = vadd.f32 %v284, %v373
    %v375 = vtanh.pop %v374
    %v376 = vsub.f32 1.0, %v365
    %378 = vrot.lane.b32.xlu0 %v375, 64
    %v379 = vpop.permute.xlu0 %378
    %v381 = vmul.f32 %v376, %v379
    %v382 = vmul.f32 %v365, 0.0
    %v383 = vadd.f32 %v381, %v382
    %385 = vrot.lane.b32.xlu0 %v383, 64
    %v386 = vpop.permute.xlu0 %385
    %vm388 = vcmask 261120
    %389 = vst.msk [vmem:[#allocation3] sm:$0xff] %vm388, %v386
    %390 = vrot.lane.b32.xlu0 %v383, 32
    %v391 = vpop.permute.xlu0 %390
    %393 = vst.msk [vmem:[#allocation4 + $0x38] sm:$0xff] %vm388, %v391
    %v394 = vld [vmem:[#allocation2 + $0x10] sm:$0xff]
    %v395 = vld [vmem:[#allocation2 + $0x18] sm:$0xff]
    %v396 = vsel %vm112, %v386, 0
    %398 = vmatprep.subr.mxu0 %v267
    %399 = vmatpush1.msra.mxu0 %v266
    %400 = vmatprep.subr.mxu0 %v269
    %401 = vmatpush1.msra.mxu0 %v268
    %402 = vmatprep.subr.mxu0 %v271
    %403 = vmatpush1.msra.mxu0 %v270
    %404 = vmatprep.subr.mxu0 %v273
    %405 = vmatpush1.msra.mxu0 %v272
    %406 = vmatprep.subr.mxu0 %v275
    %407 = vmatpush1.msra.mxu0 %v274
    %408 = vmatprep.subr.mxu0 %v277
    %409 = vmatpush1.msra.mxu0 %v276
    %410 = vmatprep.subr.mxu0 %v279
    %411 = vmatpush1.msra.mxu0 %v278
    %412 = vmatprep.subr.mxu0 %v281
    %413 = vmatpush1.msra.mxu0 %v280
    %414 = vmatprep.subr.mxu0 0.0
    %415 = vmatpush1.msra.mxu0 0.0
    %416 = vmatprep.subr.mxu0 0.0
    %417 = vmatpush1.msra.mxu0 0.0
    %418 = vmatprep.subr.mxu0 0.0
    %419 = vmatpush1.msra.mxu0 0.0
    %420 = vmatprep.subr.mxu0 0.0
    %421 = vmatpush1.msra.mxu0 0.0
    %422 = vmatprep.subr.mxu0 0.0
    %423 = vmatpush1.msra.mxu0 0.0
    %424 = vmatprep.subr.mxu0 0.0
    %425 = vmatpush1.msra.mxu0 0.0
    %426 = vmatprep.subr.mxu0 0.0
    %427 = vmatpush1.msra.mxu0 0.0
    %428 = vmatprep.subr.mxu0 0.0
    %429 = vmatpush1.msra.mxu0 0.0
    %430 = vmatprep.subr.mxu0 0.0
    %431 = vmatpush1.msra.mxu0 0.0
    %432 = vmatprep.subr.mxu0 0.0
    %433 = vmatpush1.msra.mxu0 0.0
    %434 = vmatprep.subr.mxu0 0.0
    %435 = vmatpush1.msra.mxu0 0.0
    %436 = vmatprep.subr.mxu0 0.0
    %437 = vmatpush1.msra.mxu0 0.0
    %438 = vmatprep.subr.mxu0 0.0
    %439 = vmatpush1.msra.mxu0 0.0
    %440 = vmatprep.subr.mxu0 0.0
    %441 = vmatpush1.msra.mxu0 0.0
    %442 = vmatprep.subr.mxu0 0.0
    %443 = vmatpush1.msra.mxu0 0.0
    %444 = vmatprep.subr.mxu0 0.0
    %445 = vmatpush1.msra.mxu0 0.0
    %446 = vmatprep.subr.mxu0 0.0
    %447 = vmatpush1.msra.mxu0 0.0
    %448 = vmatprep.subr.mxu0 0.0
    %449 = vmatpush1.msra.mxu0 0.0
    %450 = vmatprep.subr.mxu0 0.0
    %451 = vmatpush1.msra.mxu0 0.0
    %452 = vmatprep.subr.mxu0 0.0
    %453 = vmatpush1.msra.mxu0 0.0
    %454 = vmatprep.subr.mxu0 0.0
    %455 = vmatpush1.msra.mxu0 0.0
    %456 = vmatprep.subr.mxu0 0.0
    %457 = vmatpush1.msra.mxu0 0.0
    %458 = vmatprep.subr.mxu0 0.0
    %459 = vmatpush1.msra.mxu0 0.0
    %460 = vmatprep.subr.mxu0 0.0
    %461 = vmatpush1.msra.mxu0 0.0
    %462 = vmatprep.mubr.f32.mxu0 0.0
    %463 = vmatmul.mubr.f32.gmra.mrb[0].mxu0 %v396
    %v464 = vpop.f32.mrb[0].mxu0
    %v465 = vadd.f32 0.0, %v464
    %v466 = vpop.f32.mrb[0].mxu0
    %v467 = vadd.f32 0.0, %v466
    %468 = vdwg.mxu0
    %v469 = vadd.f32 %v394, %v465
    %v470 = vxor.u32 %v469, 2147483648
    %v471 = vmul.f32 %v470, 1.442695
    %v472 = vpow.pop %v471
    %v473 = vadd.f32 %v472, 1.0
    %v474 = vrcp.pop %v473
    %v475 = vmul.f32 1.0, %v474
    %v476 = vadd.f32 %v467, %v370
    %v477 = vmul.f32 %v475, %v476
    %v478 = vadd.f32 %v395, %v477
    %v479 = vtanh.pop %v478
    %v480 = vsub.f32 1.0, %v475
    %482 = vrot.lane.b32.xlu0 %v479, 64
    %v483 = vpop.permute.xlu0 %482
    %v485 = vmul.f32 %v480, %v483
    %v486 = vmul.f32 %v475, %v383
    %v487 = vadd.f32 %v485, %v486
    %489 = vrot.lane.b32.xlu0 %v487, 64
    %v490 = vpop.permute.xlu0 %489
    %492 = vst.msk [vmem:[#allocation3 + $0x8] sm:$0xff] %vm388, %v490
    %493 = vrot.lane.b32.xlu0 %v487, 32
    %v494 = vpop.permute.xlu0 %493
    %496 = vst.msk [vmem:[#allocation4 + $0x30] sm:$0xff] %vm388, %v494
    %v497 = vld [vmem:[#allocation2 + $0x20] sm:$0xff]
    %v498 = vld [vmem:[#allocation2 + $0x28] sm:$0xff]
    %v499 = vsel %vm112, %v490, 0
    %501 = vmatprep.subr.mxu0 %v267
    %502 = vmatpush1.msra.mxu0 %v266
    %503 = vmatprep.subr.mxu0 %v269
    %504 = vmatpush1.msra.mxu0 %v268
    %505 = vmatprep.subr.mxu0 %v271
    %506 = vmatpush1.msra.mxu0 %v270
    %507 = vmatprep.subr.mxu0 %v273
    %508 = vmatpush1.msra.mxu0 %v272
    %509 = vmatprep.subr.mxu0 %v275
    %510 = vmatpush1.msra.mxu0 %v274
    %511 = vmatprep.subr.mxu0 %v277
    %512 = vmatpush1.msra.mxu0 %v276
    %513 = vmatprep.subr.mxu0 %v279
    %514 = vmatpush1.msra.mxu0 %v278
    %515 = vmatprep.subr.mxu0 %v281
    %516 = vmatpush1.msra.mxu0 %v280
    %517 = vmatprep.subr.mxu0 0.0
    %518 = vmatpush1.msra.mxu0 0.0
    %519 = vmatprep.subr.mxu0 0.0
    %520 = vmatpush1.msra.mxu0 0.0
    %521 = vmatprep.subr.mxu0 0.0
    %522 = vmatpush1.msra.mxu0 0.0
    %523 = vmatprep.subr.mxu0 0.0
    %524 = vmatpush1.msra.mxu0 0.0
    %525 = vmatprep.subr.mxu0 0.0
    %526 = vmatpush1.msra.mxu0 0.0
    %527 = vmatprep.subr.mxu0 0.0
    %528 = vmatpush1.msra.mxu0 0.0
    %529 = vmatprep.subr.mxu0 0.0
    %530 = vmatpush1.msra.mxu0 0.0
    %531 = vmatprep.subr.mxu0 0.0
    %532 = vmatpush1.msra.mxu0 0.0
    %533 = vmatprep.subr.mxu0 0.0
    %534 = vmatpush1.msra.mxu0 0.0
    %535 = vmatprep.subr.mxu0 0.0
    %536 = vmatpush1.msra.mxu0 0.0
    %537 = vmatprep.subr.mxu0 0.0
    %538 = vmatpush1.msra.mxu0 0.0
    %539 = vmatprep.subr.mxu0 0.0
    %540 = vmatpush1.msra.mxu0 0.0
    %541 = vmatprep.subr.mxu0 0.0
    %542 = vmatpush1.msra.mxu0 0.0
    %543 = vmatprep.subr.mxu0 0.0
    %544 = vmatpush1.msra.mxu0 0.0
    %545 = vmatprep.subr.mxu0 0.0
    %546 = vmatpush1.msra.mxu0 0.0
    %547 = vmatprep.subr.mxu0 0.0
    %548 = vmatpush1.msra.mxu0 0.0
    %549 = vmatprep.subr.mxu0 0.0
    %550 = vmatpush1.msra.mxu0 0.0
    %551 = vmatprep.subr.mxu0 0.0
    %552 = vmatpush1.msra.mxu0 0.0
    %553 = vmatprep.subr.mxu0 0.0
    %554 = vmatpush1.msra.mxu0 0.0
    %555 = vmatprep.subr.mxu0 0.0
    %556 = vmatpush1.msra.mxu0 0.0
    %557 = vmatprep.subr.mxu0 0.0
    %558 = vmatpush1.msra.mxu0 0.0
    %559 = vmatprep.subr.mxu0 0.0
    %560 = vmatpush1.msra.mxu0 0.0
    %561 = vmatprep.subr.mxu0 0.0
    %562 = vmatpush1.msra.mxu0 0.0
    %563 = vmatprep.subr.mxu0 0.0
    %564 = vmatpush1.msra.mxu0 0.0
    %565 = vmatprep.mubr.f32.mxu0 0.0
    %566 = vmatmul.mubr.f32.gmra.mrb[0].mxu0 %v499
    %v567 = vpop.f32.mrb[0].mxu0
    %v568 = vadd.f32 0.0, %v567
    %v569 = vpop.f32.mrb[0].mxu0
    %v570 = vadd.f32 0.0, %v569
    %571 = vdwg.mxu0
    %v572 = vadd.f32 %v497, %v568
    %v573 = vxor.u32 %v572, 2147483648
    %v574 = vmul.f32 %v573, 1.442695
    %v575 = vpow.pop %v574
    %v576 = vadd.f32 %v575, 1.0
    %v577 = vrcp.pop %v576
    %v578 = vmul.f32 1.0, %v577
    %v579 = vadd.f32 %v570, %v370
    %v580 = vmul.f32 %v578, %v579
    %v581 = vadd.f32 %v498, %v580
    %v582 = vtanh.pop %v581
    %v583 = vsub.f32 1.0, %v578
    %585 = vrot.lane.b32.xlu0 %v582, 64
    %v586 = vpop.permute.xlu0 %585
    %v588 = vmul.f32 %v583, %v586
    %v589 = vmul.f32 %v578, %v487
    %v590 = vadd.f32 %v588, %v589
    %592 = vrot.lane.b32.xlu0 %v590, 64
    %v593 = vpop.permute.xlu0 %592
    %595 = vst.msk [vmem:[#allocation3 + $0x10] sm:$0xff] %vm388, %v593
    %596 = vrot.lane.b32.xlu0 %v590, 32
    %v597 = vpop.permute.xlu0 %596
    %599 = vst.msk [vmem:[#allocation4 + $0x28] sm:$0xff] %vm388, %v597
    %v600 = vld [vmem:[#allocation2 + $0x30] sm:$0xff]
    %v601 = vld [vmem:[#allocation2 + $0x38] sm:$0xff]
    %v602 = vsel %vm112, %v593, 0
    %604 = vmatprep.subr.mxu0 %v267
    %605 = vmatpush1.msra.mxu0 %v266
    %606 = vmatprep.subr.mxu0 %v269
    %607 = vmatpush1.msra.mxu0 %v268
    %608 = vmatprep.subr.mxu0 %v271
    %609 = vmatpush1.msra.mxu0 %v270
    %610 = vmatprep.subr.mxu0 %v273
    %611 = vmatpush1.msra.mxu0 %v272
    %612 = vmatprep.subr.mxu0 %v275
    %613 = vmatpush1.msra.mxu0 %v274
    %614 = vmatprep.subr.mxu0 %v277
    %615 = vmatpush1.msra.mxu0 %v276
    %616 = vmatprep.subr.mxu0 %v279
    %617 = vmatpush1.msra.mxu0 %v278
    %618 = vmatprep.subr.mxu0 %v281
    %619 = vmatpush1.msra.mxu0 %v280
    %620 = vmatprep.subr.mxu0 0.0
    %621 = vmatpush1.msra.mxu0 0.0
    %622 = vmatprep.subr.mxu0 0.0
    %623 = vmatpush1.msra.mxu0 0.0
    %624 = vmatprep.subr.mxu0 0.0
    %625 = vmatpush1.msra.mxu0 0.0
    %626 = vmatprep.subr.mxu0 0.0
    %627 = vmatpush1.msra.mxu0 0.0
    %628 = vmatprep.subr.mxu0 0.0
    %629 = vmatpush1.msra.mxu0 0.0
    %630 = vmatprep.subr.mxu0 0.0
    %631 = vmatpush1.msra.mxu0 0.0
    %632 = vmatprep.subr.mxu0 0.0
    %633 = vmatpush1.msra.mxu0 0.0
    %634 = vmatprep.subr.mxu0 0.0
    %635 = vmatpush1.msra.mxu0 0.0
    %636 = vmatprep.subr.mxu0 0.0
    %637 = vmatpush1.msra.mxu0 0.0
    %638 = vmatprep.subr.mxu0 0.0
    %639 = vmatpush1.msra.mxu0 0.0
    %640 = vmatprep.subr.mxu0 0.0
    %641 = vmatpush1.msra.mxu0 0.0
    %642 = vmatprep.subr.mxu0 0.0
    %643 = vmatpush1.msra.mxu0 0.0
    %644 = vmatprep.subr.mxu0 0.0
    %645 = vmatpush1.msra.mxu0 0.0
    %646 = vmatprep.subr.mxu0 0.0
    %647 = vmatpush1.msra.mxu0 0.0
    %648 = vmatprep.subr.mxu0 0.0
    %649 = vmatpush1.msra.mxu0 0.0
    %650 = vmatprep.subr.mxu0 0.0
    %651 = vmatpush1.msra.mxu0 0.0
    %652 = vmatprep.subr.mxu0 0.0
    %653 = vmatpush1.msra.mxu0 0.0
    %654 = vmatprep.subr.mxu0 0.0
    %655 = vmatpush1.msra.mxu0 0.0
    %656 = vmatprep.subr.mxu0 0.0
    %657 = vmatpush1.msra.mxu0 0.0
    %658 = vmatprep.subr.mxu0 0.0
    %659 = vmatpush1.msra.mxu0 0.0
    %660 = vmatprep.subr.mxu0 0.0
    %661 = vmatpush1.msra.mxu0 0.0
    %662 = vmatprep.subr.mxu0 0.0
    %663 = vmatpush1.msra.mxu0 0.0
    %664 = vmatprep.subr.mxu0 0.0
    %665 = vmatpush1.msra.mxu0 0.0
    %666 = vmatprep.subr.mxu0 0.0
    %667 = vmatpush1.msra.mxu0 0.0
    %668 = vmatprep.mubr.f32.mxu0 0.0
    %669 = vmatmul.mubr.f32.gmra.mrb[0].mxu0 %v602
    %v670 = vpop.f32.mrb[0].mxu0
    %v671 = vadd.f32 0.0, %v670
    %v672 = vpop.f32.mrb[0].mxu0
    %v673 = vadd.f32 0.0, %v672
    %674 = vdwg.mxu0
    %v675 = vadd.f32 %v600, %v671
    %v676 = vxor.u32 %v675, 2147483648
    %v677 = vmul.f32 %v676, 1.442695
    %v678 = vpow.pop %v677
    %v679 = vadd.f32 %v678, 1.0
    %v680 = vrcp.pop %v679
    %v681 = vmul.f32 1.0, %v680
    %v682 = vadd.f32 %v673, %v370
    %v683 = vmul.f32 %v681, %v682
    %v684 = vadd.f32 %v601, %v683
    %v685 = vtanh.pop %v684
    %v686 = vsub.f32 1.0, %v681
    %688 = vrot.lane.b32.xlu0 %v685, 64
    %v689 = vpop.permute.xlu0 %688
    %v691 = vmul.f32 %v686, %v689
    %v692 = vmul.f32 %v681, %v590
    %v693 = vadd.f32 %v691, %v692
    %695 = vrot.lane.b32.xlu0 %v693, 64
    %v696 = vpop.permute.xlu0 %695
    %698 = vst.msk [vmem:[#allocation3 + $0x18] sm:$0xff] %vm388, %v696
    %699 = vrot.lane.b32.xlu0 %v693, 32
    %v700 = vpop.permute.xlu0 %699
    %702 = vst.msk [vmem:[#allocation4 + $0x20] sm:$0xff] %vm388, %v700
    %v703 = vld [vmem:[#allocation2 + $0x40] sm:$0xff]
    %v704 = vld [vmem:[#allocation2 + $0x48] sm:$0xff]
    %v705 = vsel %vm112, %v696, 0
    %707 = vmatprep.subr.mxu0 %v267
    %708 = vmatpush1.msra.mxu0 %v266
    %709 = vmatprep.subr.mxu0 %v269
    %710 = vmatpush1.msra.mxu0 %v268
    %711 = vmatprep.subr.mxu0 %v271
    %712 = vmatpush1.msra.mxu0 %v270
    %713 = vmatprep.subr.mxu0 %v273
    %714 = vmatpush1.msra.mxu0 %v272
    %715 = vmatprep.subr.mxu0 %v275
    %716 = vmatpush1.msra.mxu0 %v274
    %717 = vmatprep.subr.mxu0 %v277
    %718 = vmatpush1.msra.mxu0 %v276
    %719 = vmatprep.subr.mxu0 %v279
    %720 = vmatpush1.msra.mxu0 %v278
    %721 = vmatprep.subr.mxu0 %v281
    %722 = vmatpush1.msra.mxu0 %v280
    %723 = vmatprep.subr.mxu0 0.0
    %724 = vmatpush1.msra.mxu0 0.0
    %725 = vmatprep.subr.mxu0 0.0
    %726 = vmatpush1.msra.mxu0 0.0
    %727 = vmatprep.subr.mxu0 0.0
    %728 = vmatpush1.msra.mxu0 0.0
    %729 = vmatprep.subr.mxu0 0.0
    %730 = vmatpush1.msra.mxu0 0.0
    %731 = vmatprep.subr.mxu0 0.0
    %732 = vmatpush1.msra.mxu0 0.0
    %733 = vmatprep.subr.mxu0 0.0
    %734 = vmatpush1.msra.mxu0 0.0
    %735 = vmatprep.subr.mxu0 0.0
    %736 = vmatpush1.msra.mxu0 0.0
    %737 = vmatprep.subr.mxu0 0.0
    %738 = vmatpush1.msra.mxu0 0.0
    %739 = vmatprep.subr.mxu0 0.0
    %740 = vmatpush1.msra.mxu0 0.0
    %741 = vmatprep.subr.mxu0 0.0
    %742 = vmatpush1.msra.mxu0 0.0
    %743 = vmatprep.subr.mxu0 0.0
    %744 = vmatpush1.msra.mxu0 0.0
    %745 = vmatprep.subr.mxu0 0.0
    %746 = vmatpush1.msra.mxu0 0.0
    %747 = vmatprep.subr.mxu0 0.0
    %748 = vmatpush1.msra.mxu0 0.0
    %749 = vmatprep.subr.mxu0 0.0
    %750 = vmatpush1.msra.mxu0 0.0
    %751 = vmatprep.subr.mxu0 0.0
    %752 = vmatpush1.msra.mxu0 0.0
    %753 = vmatprep.subr.mxu0 0.0
    %754 = vmatpush1.msra.mxu0 0.0
    %755 = vmatprep.subr.mxu0 0.0
    %756 = vmatpush1.msra.mxu0 0.0
    %757 = vmatprep.subr.mxu0 0.0
    %758 = vmatpush1.msra.mxu0 0.0
    %759 = vmatprep.subr.mxu0 0.0
    %760 = vmatpush1.msra.mxu0 0.0
    %761 = vmatprep.subr.mxu0 0.0
    %762 = vmatpush1.msra.mxu0 0.0
    %763 = vmatprep.subr.mxu0 0.0
    %764 = vmatpush1.msra.mxu0 0.0
    %765 = vmatprep.subr.mxu0 0.0
    %766 = vmatpush1.msra.mxu0 0.0
    %767 = vmatprep.subr.mxu0 0.0
    %768 = vmatpush1.msra.mxu0 0.0
    %769 = vmatprep.subr.mxu0 0.0
    %770 = vmatpush1.msra.mxu0 0.0
    %771 = vmatprep.mubr.f32.mxu0 0.0
    %772 = vmatmul.mubr.f32.gmra.mrb[0].mxu0 %v705
    %v773 = vpop.f32.mrb[0].mxu0
    %v774 = vadd.f32 0.0, %v773
    %v775 = vpop.f32.mrb[0].mxu0
    %v776 = vadd.f32 0.0, %v775
    %777 = vdwg.mxu0
    %v778 = vadd.f32 %v703, %v774
    %v779 = vxor.u32 %v778, 2147483648
    %v780 = vmul.f32 %v779, 1.442695
    %v781 = vpow.pop %v780
    %v782 = vadd.f32 %v781, 1.0
    %v783 = vrcp.pop %v782
    %v784 = vmul.f32 1.0, %v783
    %v785 = vadd.f32 %v776, %v370
    %v786 = vmul.f32 %v784, %v785
    %v787 = vadd.f32 %v704, %v786
    %v788 = vtanh.pop %v787
    %v789 = vsub.f32 1.0, %v784
    %791 = vrot.lane.b32.xlu0 %v788, 64
    %v792 = vpop.permute.xlu0 %791
    %v794 = vmul.f32 %v789, %v792
    %v795 = vmul.f32 %v784, %v693
    %v796 = vadd.f32 %v794, %v795
    %798 = vrot.lane.b32.xlu0 %v796, 64
    %v799 = vpop.permute.xlu0 %798
    %801 = vst.msk [vmem:[#allocation3 + $0x20] sm:$0xff] %vm388, %v799
    %802 = vrot.lane.b32.xlu0 %v796, 32
    %v803 = vpop.permute.xlu0 %802
    %805 = vst.msk [vmem:[#allocation4 + $0x18] sm:$0xff] %vm388, %v803
    %v806 = vld [vmem:[#allocation2 + $0x50] sm:$0xff]
    %v807 = vld [vmem:[#allocation2 + $0x58] sm:$0xff]
    %v808 = vsel %vm112, %v799, 0
    %810 = vmatprep.subr.mxu0 %v267
    %811 = vmatpush1.msra.mxu0 %v266
    %812 = vmatprep.subr.mxu0 %v269
    %813 = vmatpush1.msra.mxu0 %v268
    %814 = vmatprep.subr.mxu0 %v271
    %815 = vmatpush1.msra.mxu0 %v270
    %816 = vmatprep.subr.mxu0 %v273
    %817 = vmatpush1.msra.mxu0 %v272
    %818 = vmatprep.subr.mxu0 %v275
    %819 = vmatpush1.msra.mxu0 %v274
    %820 = vmatprep.subr.mxu0 %v277
    %821 = vmatpush1.msra.mxu0 %v276
    %822 = vmatprep.subr.mxu0 %v279
    %823 = vmatpush1.msra.mxu0 %v278
    %824 = vmatprep.subr.mxu0 %v281
    %825 = vmatpush1.msra.mxu0 %v280
    %826 = vmatprep.subr.mxu0 0.0
    %827 = vmatpush1.msra.mxu0 0.0
    %828 = vmatprep.subr.mxu0 0.0
    %829 = vmatpush1.msra.mxu0 0.0
    %830 = vmatprep.subr.mxu0 0.0
    %831 = vmatpush1.msra.mxu0 0.0
    %832 = vmatprep.subr.mxu0 0.0
    %833 = vmatpush1.msra.mxu0 0.0
    %834 = vmatprep.subr.mxu0 0.0
    %835 = vmatpush1.msra.mxu0 0.0
    %836 = vmatprep.subr.mxu0 0.0
    %837 = vmatpush1.msra.mxu0 0.0
    %838 = vmatprep.subr.mxu0 0.0
    %839 = vmatpush1.msra.mxu0 0.0
    %840 = vmatprep.subr.mxu0 0.0
    %841 = vmatpush1.msra.mxu0 0.0
    %842 = vmatprep.subr.mxu0 0.0
    %843 = vmatpush1.msra.mxu0 0.0
    %844 = vmatprep.subr.mxu0 0.0
    %845 = vmatpush1.msra.mxu0 0.0
    %846 = vmatprep.subr.mxu0 0.0
    %847 = vmatpush1.msra.mxu0 0.0
    %848 = vmatprep.subr.mxu0 0.0
    %849 = vmatpush1.msra.mxu0 0.0
    %850 = vmatprep.subr.mxu0 0.0
    %851 = vmatpush1.msra.mxu0 0.0
    %852 = vmatprep.subr.mxu0 0.0
    %853 = vmatpush1.msra.mxu0 0.0
    %854 = vmatprep.subr.mxu0 0.0
    %855 = vmatpush1.msra.mxu0 0.0
    %856 = vmatprep.subr.mxu0 0.0
    %857 = vmatpush1.msra.mxu0 0.0
    %858 = vmatprep.subr.mxu0 0.0
    %859 = vmatpush1.msra.mxu0 0.0
    %860 = vmatprep.subr.mxu0 0.0
    %861 = vmatpush1.msra.mxu0 0.0
    %862 = vmatprep.subr.mxu0 0.0
    %863 = vmatpush1.msra.mxu0 0.0
    %864 = vmatprep.subr.mxu0 0.0
    %865 = vmatpush1.msra.mxu0 0.0
    %866 = vmatprep.subr.mxu0 0.0
    %867 = vmatpush1.msra.mxu0 0.0
    %868 = vmatprep.subr.mxu0 0.0
    %869 = vmatpush1.msra.mxu0 0.0
    %870 = vmatprep.subr.mxu0 0.0
    %871 = vmatpush1.msra.mxu0 0.0
    %872 = vmatprep.subr.mxu0 0.0
    %873 = vmatpush1.msra.mxu0 0.0
    %874 = vmatprep.mubr.f32.mxu0 0.0
    %875 = vmatmul.mubr.f32.gmra.mrb[0].mxu0 %v808
    %v876 = vpop.f32.mrb[0].mxu0
    %v877 = vadd.f32 0.0, %v876
    %v878 = vpop.f32.mrb[0].mxu0
    %v879 = vadd.f32 0.0, %v878
    %880 = vdwg.mxu0
    %v881 = vadd.f32 %v806, %v877
    %v882 = vxor.u32 %v881, 2147483648
    %v883 = vmul.f32 %v882, 1.442695
    %v884 = vpow.pop %v883
    %v885 = vadd.f32 %v884, 1.0
    %v886 = vrcp.pop %v885
    %v887 = vmul.f32 1.0, %v886
    %v888 = vadd.f32 %v879, %v370
    %v889 = vmul.f32 %v887, %v888
    %v890 = vadd.f32 %v807, %v889
    %v891 = vtanh.pop %v890
    %v892 = vsub.f32 1.0, %v887
    %894 = vrot.lane.b32.xlu0 %v891, 64
    %v895 = vpop.permute.xlu0 %894
    %v897 = vmul.f32 %v892, %v895
    %v898 = vmul.f32 %v887, %v796
    %v899 = vadd.f32 %v897, %v898
    %901 = vrot.lane.b32.xlu0 %v899, 64
    %v902 = vpop.permute.xlu0 %901
    %904 = vst.msk [vmem:[#allocation3 + $0x28] sm:$0xff] %vm388, %v902
    %905 = vrot.lane.b32.xlu0 %v899, 32
    %v906 = vpop.permute.xlu0 %905
    %908 = vst.msk [vmem:[#allocation4 + $0x10] sm:$0xff] %vm388, %v906
    %v909 = vld [vmem:[#allocation2 + $0x60] sm:$0xff]
    %v910 = vld [vmem:[#allocation2 + $0x68] sm:$0xff]
    %v911 = vsel %vm112, %v902, 0
    %913 = vmatprep.subr.mxu0 %v267
    %914 = vmatpush1.msra.mxu0 %v266
    %915 = vmatprep.subr.mxu0 %v269
    %916 = vmatpush1.msra.mxu0 %v268
    %917 = vmatprep.subr.mxu0 %v271
    %918 = vmatpush1.msra.mxu0 %v270
    %919 = vmatprep.subr.mxu0 %v273
    %920 = vmatpush1.msra.mxu0 %v272
    %921 = vmatprep.subr.mxu0 %v275
    %922 = vmatpush1.msra.mxu0 %v274
    %923 = vmatprep.subr.mxu0 %v277
    %924 = vmatpush1.msra.mxu0 %v276
    %925 = vmatprep.subr.mxu0 %v279
    %926 = vmatpush1.msra.mxu0 %v278
    %927 = vmatprep.subr.mxu0 %v281
    %928 = vmatpush1.msra.mxu0 %v280
    %929 = vmatprep.subr.mxu0 0.0
    %930 = vmatpush1.msra.mxu0 0.0
    %931 = vmatprep.subr.mxu0 0.0
    %932 = vmatpush1.msra.mxu0 0.0
    %933 = vmatprep.subr.mxu0 0.0
    %934 = vmatpush1.msra.mxu0 0.0
    %935 = vmatprep.subr.mxu0 0.0
    %936 = vmatpush1.msra.mxu0 0.0
    %937 = vmatprep.subr.mxu0 0.0
    %938 = vmatpush1.msra.mxu0 0.0
    %939 = vmatprep.subr.mxu0 0.0
    %940 = vmatpush1.msra.mxu0 0.0
    %941 = vmatprep.subr.mxu0 0.0
    %942 = vmatpush1.msra.mxu0 0.0
    %943 = vmatprep.subr.mxu0 0.0
    %944 = vmatpush1.msra.mxu0 0.0
    %945 = vmatprep.subr.mxu0 0.0
    %946 = vmatpush1.msra.mxu0 0.0
    %947 = vmatprep.subr.mxu0 0.0
    %948 = vmatpush1.msra.mxu0 0.0
    %949 = vmatprep.subr.mxu0 0.0
    %950 = vmatpush1.msra.mxu0 0.0
    %951 = vmatprep.subr.mxu0 0.0
    %952 = vmatpush1.msra.mxu0 0.0
    %953 = vmatprep.subr.mxu0 0.0
    %954 = vmatpush1.msra.mxu0 0.0
    %955 = vmatprep.subr.mxu0 0.0
    %956 = vmatpush1.msra.mxu0 0.0
    %957 = vmatprep.subr.mxu0 0.0
    %958 = vmatpush1.msra.mxu0 0.0
    %959 = vmatprep.subr.mxu0 0.0
    %960 = vmatpush1.msra.mxu0 0.0
    %961 = vmatprep.subr.mxu0 0.0
    %962 = vmatpush1.msra.mxu0 0.0
    %963 = vmatprep.subr.mxu0 0.0
    %964 = vmatpush1.msra.mxu0 0.0
    %965 = vmatprep.subr.mxu0 0.0
    %966 = vmatpush1.msra.mxu0 0.0
    %967 = vmatprep.subr.mxu0 0.0
    %968 = vmatpush1.msra.mxu0 0.0
    %969 = vmatprep.subr.mxu0 0.0
    %970 = vmatpush1.msra.mxu0 0.0
    %971 = vmatprep.subr.mxu0 0.0
    %972 = vmatpush1.msra.mxu0 0.0
    %973 = vmatprep.subr.mxu0 0.0
    %974 = vmatpush1.msra.mxu0 0.0
    %975 = vmatprep.subr.mxu0 0.0
    %976 = vmatpush1.msra.mxu0 0.0
    %977 = vmatprep.mubr.f32.mxu0 0.0
    %978 = vmatmul.mubr.f32.gmra.mrb[0].mxu0 %v911
    %v979 = vpop.f32.mrb[0].mxu0
    %v980 = vadd.f32 0.0, %v979
    %v981 = vpop.f32.mrb[0].mxu0
    %v982 = vadd.f32 0.0, %v981
    %983 = vdwg.mxu0
    %v984 = vadd.f32 %v909, %v980
    %v985 = vxor.u32 %v984, 2147483648
    %v986 = vmul.f32 %v985, 1.442695
    %v987 = vpow.pop %v986
    %v988 = vadd.f32 %v987, 1.0
    %v989 = vrcp.pop %v988
    %v990 = vmul.f32 1.0, %v989
    %v991 = vadd.f32 %v982, %v370
    %v992 = vmul.f32 %v990, %v991
    %v993 = vadd.f32 %v910, %v992
    %v994 = vtanh.pop %v993
    %v995 = vsub.f32 1.0, %v990
    %997 = vrot.lane.b32.xlu0 %v994, 64
    %v998 = vpop.permute.xlu0 %997
    %v1000 = vmul.f32 %v995, %v998
    %v1001 = vmul.f32 %v990, %v899
    %v1002 = vadd.f32 %v1000, %v1001
    %1004 = vrot.lane.b32.xlu0 %v1002, 64
    %v1005 = vpop.permute.xlu0 %1004
    %1007 = vst.msk [vmem:[#allocation3 + $0x30] sm:$0xff] %vm388, %v1005
    %1008 = vrot.lane.b32.xlu0 %v1002, 32
    %v1009 = vpop.permute.xlu0 %1008
    %1011 = vst.msk [vmem:[#allocation4 + $0x8] sm:$0xff] %vm388, %v1009
    %v1012 = vld [vmem:[#allocation2 + $0x70] sm:$0xff]
    %v1013 = vld [vmem:[#allocation2 + $0x78] sm:$0xff]
    %v1014 = vsel %vm112, %v1005, 0
    %1016 = vmatprep.subr.mxu0 %v267
    %1017 = vmatpush1.msra.mxu0 %v266
    %1018 = vmatprep.subr.mxu0 %v269
    %1019 = vmatpush1.msra.mxu0 %v268
    %1020 = vmatprep.subr.mxu0 %v271
    %1021 = vmatpush1.msra.mxu0 %v270
    %1022 = vmatprep.subr.mxu0 %v273
    %1023 = vmatpush1.msra.mxu0 %v272
    %1024 = vmatprep.subr.mxu0 %v275
    %1025 = vmatpush1.msra.mxu0 %v274
    %1026 = vmatprep.subr.mxu0 %v277
    %1027 = vmatpush1.msra.mxu0 %v276
    %1028 = vmatprep.subr.mxu0 %v279
    %1029 = vmatpush1.msra.mxu0 %v278
    %1030 = vmatprep.subr.mxu0 %v281
    %1031 = vmatpush1.msra.mxu0 %v280
    %1032 = vmatprep.subr.mxu0 0.0
    %1033 = vmatpush1.msra.mxu0 0.0
    %1034 = vmatprep.subr.mxu0 0.0
    %1035 = vmatpush1.msra.mxu0 0.0
    %1036 = vmatprep.subr.mxu0 0.0
    %1037 = vmatpush1.msra.mxu0 0.0
    %1038 = vmatprep.subr.mxu0 0.0
    %1039 = vmatpush1.msra.mxu0 0.0
    %1040 = vmatprep.subr.mxu0 0.0
    %1041 = vmatpush1.msra.mxu0 0.0
    %1042 = vmatprep.subr.mxu0 0.0
    %1043 = vmatpush1.msra.mxu0 0.0
    %1044 = vmatprep.subr.mxu0 0.0
    %1045 = vmatpush1.msra.mxu0 0.0
    %1046 = vmatprep.subr.mxu0 0.0
    %1047 = vmatpush1.msra.mxu0 0.0
    %1048 = vmatprep.subr.mxu0 0.0
    %1049 = vmatpush1.msra.mxu0 0.0
    %1050 = vmatprep.subr.mxu0 0.0
    %1051 = vmatpush1.msra.mxu0 0.0
    %1052 = vmatprep.subr.mxu0 0.0
    %1053 = vmatpush1.msra.mxu0 0.0
    %1054 = vmatprep.subr.mxu0 0.0
    %1055 = vmatpush1.msra.mxu0 0.0
    %1056 = vmatprep.subr.mxu0 0.0
    %1057 = vmatpush1.msra.mxu0 0.0
    %1058 = vmatprep.subr.mxu0 0.0
    %1059 = vmatpush1.msra.mxu0 0.0
    %1060 = vmatprep.subr.mxu0 0.0
    %1061 = vmatpush1.msra.mxu0 0.0
    %1062 = vmatprep.subr.mxu0 0.0
    %1063 = vmatpush1.msra.mxu0 0.0
    %1064 = vmatprep.subr.mxu0 0.0
    %1065 = vmatpush1.msra.mxu0 0.0
    %1066 = vmatprep.subr.mxu0 0.0
    %1067 = vmatpush1.msra.mxu0 0.0
    %1068 = vmatprep.subr.mxu0 0.0
    %1069 = vmatpush1.msra.mxu0 0.0
    %1070 = vmatprep.subr.mxu0 0.0
    %1071 = vmatpush1.msra.mxu0 0.0
    %1072 = vmatprep.subr.mxu0 0.0
    %1073 = vmatpush1.msra.mxu0 0.0
    %1074 = vmatprep.subr.mxu0 0.0
    %1075 = vmatpush1.msra.mxu0 0.0
    %1076 = vmatprep.subr.mxu0 0.0
    %1077 = vmatpush1.msra.mxu0 0.0
    %1078 = vmatprep.subr.mxu0 0.0
    %1079 = vmatpush1.msra.mxu0 0.0
    %1080 = vmatprep.mubr.f32.mxu0 0.0
    %1081 = vmatmul.mubr.f32.gmra.mrb[0].mxu0 %v1014
    %v1082 = vpop.f32.mrb[0].mxu0
    %v1083 = vadd.f32 0.0, %v1082
    %v1084 = vpop.f32.mrb[0].mxu0
    %v1085 = vadd.f32 0.0, %v1084
    %1086 = vdwg.mxu0
    %v1087 = vadd.f32 %v1012, %v1083
    %v1088 = vxor.u32 %v1087, 2147483648
    %v1089 = vmul.f32 %v1088, 1.442695
    %v1090 = vpow.pop %v1089
    %v1091 = vadd.f32 %v1090, 1.0
    %v1092 = vrcp.pop %v1091
    %v1093 = vmul.f32 1.0, %v1092
    %v1094 = vadd.f32 %v1085, %v370
    %v1095 = vmul.f32 %v1093, %v1094
    %v1096 = vadd.f32 %v1013, %v1095
    %v1097 = vtanh.pop %v1096
    %v1098 = vsub.f32 1.0, %v1093
    %1100 = vrot.lane.b32.xlu0 %v1097, 64
    %v1101 = vpop.permute.xlu0 %1100
    %v1103 = vmul.f32 %v1098, %v1101
    %v1104 = vmul.f32 %v1093, %v1002
    %v1105 = vadd.f32 %v1103, %v1104
    %1107 = vrot.lane.b32.xlu0 %v1105, 64
    %v1108 = vpop.permute.xlu0 %1107
    %1110 = vst.msk [vmem:[#allocation3 + $0x38] sm:$0xff] %vm388, %v1108
    %1111 = vrot.lane.b32.xlu0 %v1105, 32
    %v1112 = vpop.permute.xlu0 %1111
    %1114 = vst.msk [vmem:[#allocation4] sm:$0xff] %vm388, %v1112
    %v1115 = vld [vmem:[#allocation3] sm:$0xff]
    %v1116 = vld [vmem:[#allocation3 + $0x8] sm:$0xff]
    %v1117 = vld [vmem:[#allocation3 + $0x10] sm:$0xff]
    %v1118 = vld [vmem:[#allocation3 + $0x18] sm:$0xff]
    %v1119 = vld [vmem:[#allocation3 + $0x20] sm:$0xff]
    %v1120 = vld [vmem:[#allocation3 + $0x28] sm:$0xff]
    %v1121 = vld [vmem:[#allocation3 + $0x30] sm:$0xff]
    %v1122 = vld [vmem:[#allocation3 + $0x38] sm:$0xff]
    %v1123 = vld [vmem:[#allocation4] sm:$0xff]
    %v1124 = vld [vmem:[#allocation4 + $0x8] sm:$0xff]
    %v1125 = vld [vmem:[#allocation4 + $0x10] sm:$0xff]
    %v1126 = vld [vmem:[#allocation4 + $0x18] sm:$0xff]
    %v1127 = vld [vmem:[#allocation4 + $0x20] sm:$0xff]
    %v1128 = vld [vmem:[#allocation4 + $0x28] sm:$0xff]
    %v1129 = vld [vmem:[#allocation4 + $0x30] sm:$0xff]
    %v1130 = vld [vmem:[#allocation4 + $0x38] sm:$0xff]
    %v1131 = vld [vmem:[#allocation9] sm:$0xff]
    %v1132 = vld [vmem:[#allocation9 + $0x8] sm:$0xff]
    %v1133 = vld [vmem:[#allocation9 + $0x10] sm:$0xff]
    %v1134 = vld [vmem:[#allocation9 + $0x18] sm:$0xff]
    %v1135 = vld [vmem:[#allocation9 + $0x20] sm:$0xff]
    %v1136 = vld [vmem:[#allocation9 + $0x28] sm:$0xff]
    %v1137 = vld [vmem:[#allocation9 + $0x30] sm:$0xff]
    %v1138 = vld [vmem:[#allocation9 + $0x38] sm:$0xff]
    %v1140 = vsel %vm388, %v1123, 0
    %v1143 = vsel %vm388, %v1124, 0
    %v1146 = vsel %vm388, %v1125, 0
    %v1149 = vsel %vm388, %v1126, 0
    %v1152 = vsel %vm388, %v1127, 0
    %v1155 = vsel %vm388, %v1128, 0
    %v1158 = vsel %vm388, %v1129, 0
    %v1161 = vsel %vm388, %v1130, 0
    %1163 = vmatprep.subr.mxu0 0.0
    %1164 = vmatpush1.msra.mxu0 %v1135
    %1165 = vmatprep.subr.mxu0 0.0
    %1166 = vmatpush1.msra.mxu0 %v1136
    %1167 = vmatprep.subr.mxu0 0.0
    %1168 = vmatpush1.msra.mxu0 %v1137
    %1169 = vmatprep.subr.mxu0 0.0
    %1170 = vmatpush1.msra.mxu0 %v1138
    %1171 = vmatprep.subr.mxu0 0.0
    %1172 = vmatpush1.msra.mxu0 0.0
    %1173 = vmatprep.subr.mxu0 0.0
    %1174 = vmatpush1.msra.mxu0 0.0
    %1175 = vmatprep.subr.mxu0 0.0
    %1176 = vmatpush1.msra.mxu0 0.0
    %1177 = vmatprep.subr.mxu0 0.0
    %1178 = vmatpush1.msra.mxu0 0.0
    %1179 = vmatprep.subr.mxu0 0.0
    %1180 = vmatpush1.msra.mxu0 0.0
    %1181 = vmatprep.subr.mxu0 0.0
    %1182 = vmatpush1.msra.mxu0 0.0
    %1183 = vmatprep.subr.mxu0 0.0
    %1184 = vmatpush1.msra.mxu0 0.0
    %1185 = vmatprep.subr.mxu0 0.0
    %1186 = vmatpush1.msra.mxu0 0.0
    %1187 = vmatprep.subr.mxu0 0.0
    %1188 = vmatpush1.msra.mxu0 0.0
    %1189 = vmatprep.subr.mxu0 0.0
    %1190 = vmatpush1.msra.mxu0 0.0
    %1191 = vmatprep.subr.mxu0 0.0
    %1192 = vmatpush1.msra.mxu0 0.0
    %1193 = vmatprep.subr.mxu0 0.0
    %1194 = vmatpush1.msra.mxu0 0.0
    %1195 = vmatprep.subr.mxu0 0.0
    %1196 = vmatpush1.msra.mxu0 0.0
    %1197 = vmatprep.subr.mxu0 0.0
    %1198 = vmatpush1.msra.mxu0 0.0
    %1199 = vmatprep.subr.mxu0 0.0
    %1200 = vmatpush1.msra.mxu0 0.0
    %1201 = vmatprep.subr.mxu0 0.0
    %1202 = vmatpush1.msra.mxu0 0.0
    %1203 = vmatprep.subr.mxu0 0.0
    %1204 = vmatpush1.msra.mxu0 0.0
    %1205 = vmatprep.subr.mxu0 0.0
    %1206 = vmatpush1.msra.mxu0 0.0
    %1207 = vmatprep.subr.mxu0 0.0
    %1208 = vmatpush1.msra.mxu0 0.0
    %1209 = vmatprep.subr.mxu0 0.0
    %1210 = vmatpush1.msra.mxu0 0.0
    %1211 = vmatprep.subr.mxu0 0.0
    %1212 = vmatpush1.msra.mxu0 0.0
    %1213 = vmatprep.subr.mxu0 0.0
    %1214 = vmatpush1.msra.mxu0 0.0
    %1215 = vmatprep.subr.mxu0 0.0
    %1216 = vmatpush1.msra.mxu0 0.0
    %1217 = vmatprep.subr.mxu0 0.0
    %1218 = vmatpush1.msra.mxu0 0.0
    %1219 = vmatprep.subr.mxu0 0.0
    %1220 = vmatpush1.msra.mxu0 0.0
    %1221 = vmatprep.subr.mxu0 0.0
    %1222 = vmatpush1.msra.mxu0 0.0
    %1223 = vmatprep.subr.mxu0 0.0
    %1224 = vmatpush1.msra.mxu0 0.0
    %1225 = vmatprep.subr.mxu0 0.0
    %1226 = vmatpush1.msra.mxu0 0.0
    %1227 = vmatprep.mubr.f32.mxu0 0.0
    %1228 = vmatmul.mubr.f32.gmra.mrb[0].mxu0 %v1140
    %v1229 = vpop.f32.mrb[0].mxu0
    %v1230 = vadd.f32 0.0, %v1229
    %v1231 = vpop.f32.mrb[0].mxu0
    %1232 = vmatprep.mubr.f32.mxu0 0.0
    %1233 = vmatmul.mubr.f32.gmra.mrb[0].mxu0 %v1143
    %v1234 = vpop.f32.mrb[0].mxu0
    %v1235 = vadd.f32 0.0, %v1234
    %v1236 = vpop.f32.mrb[0].mxu0
    %1237 = vmatprep.mubr.f32.mxu0 0.0
    %1238 = vmatmul.mubr.f32.gmra.mrb[0].mxu0 %v1146
    %v1239 = vpop.f32.mrb[0].mxu0
    %v1240 = vadd.f32 0.0, %v1239
    %v1241 = vpop.f32.mrb[0].mxu0
    %1242 = vmatprep.mubr.f32.mxu0 0.0
    %1243 = vmatmul.mubr.f32.gmra.mrb[0].mxu0 %v1149
    %v1244 = vpop.f32.mrb[0].mxu0
    %v1245 = vadd.f32 0.0, %v1244
    %v1246 = vpop.f32.mrb[0].mxu0
    %1247 = vmatprep.mubr.f32.mxu0 0.0
    %1248 = vmatmul.mubr.f32.gmra.mrb[0].mxu0 %v1152
    %v1249 = vpop.f32.mrb[0].mxu0
    %v1250 = vadd.f32 0.0, %v1249
    %v1251 = vpop.f32.mrb[0].mxu0
    %1252 = vmatprep.mubr.f32.mxu0 0.0
    %1253 = vmatmul.mubr.f32.gmra.mrb[0].mxu0 %v1155
    %v1254 = vpop.f32.mrb[0].mxu0
    %v1255 = vadd.f32 0.0, %v1254
    %v1256 = vpop.f32.mrb[0].mxu0
    %1257 = vmatprep.mubr.f32.mxu0 0.0
    %1258 = vmatmul.mubr.f32.gmra.mrb[0].mxu0 %v1158
    %v1259 = vpop.f32.mrb[0].mxu0
    %v1260 = vadd.f32 0.0, %v1259
    %v1261 = vpop.f32.mrb[0].mxu0
    %1262 = vmatprep.mubr.f32.mxu0 0.0
    %1263 = vmatmul.mubr.f32.gmra.mrb[0].mxu0 %v1161
    %v1264 = vpop.f32.mrb[0].mxu0
    %v1265 = vadd.f32 0.0, %v1264
    %v1266 = vpop.f32.mrb[0].mxu0
    %1267 = vdwg.mxu0
    %v1269 = vsel %vm388, %v1115, 0
    %v1272 = vsel %vm388, %v1116, 0
    %v1275 = vsel %vm388, %v1117, 0
    %v1278 = vsel %vm388, %v1118, 0
    %v1281 = vsel %vm388, %v1119, 0
    %v1284 = vsel %vm388, %v1120, 0
    %v1287 = vsel %vm388, %v1121, 0
    %v1290 = vsel %vm388, %v1122, 0
    %1292 = vmatprep.subr.mxu0 0.0
    %1293 = vmatpush1.msra.mxu0 %v1131
    %1294 = vmatprep.subr.mxu0 0.0
    %1295 = vmatpush1.msra.mxu0 %v1132
    %1296 = vmatprep.subr.mxu0 0.0
    %1297 = vmatpush1.msra.mxu0 %v1133
    %1298 = vmatprep.subr.mxu0 0.0
    %1299 = vmatpush1.msra.mxu0 %v1134
    %1300 = vmatprep.subr.mxu0 0.0
    %1301 = vmatpush1.msra.mxu0 0.0
    %1302 = vmatprep.subr.mxu0 0.0
    %1303 = vmatpush1.msra.mxu0 0.0
    %1304 = vmatprep.subr.mxu0 0.0
    %1305 = vmatpush1.msra.mxu0 0.0
    %1306 = vmatprep.subr.mxu0 0.0
    %1307 = vmatpush1.msra.mxu0 0.0
    %1308 = vmatprep.subr.mxu0 0.0
    %1309 = vmatpush1.msra.mxu0 0.0
    %1310 = vmatprep.subr.mxu0 0.0
    %1311 = vmatpush1.msra.mxu0 0.0
    %1312 = vmatprep.subr.mxu0 0.0
    %1313 = vmatpush1.msra.mxu0 0.0
    %1314 = vmatprep.subr.mxu0 0.0
    %1315 = vmatpush1.msra.mxu0 0.0
    %1316 = vmatprep.subr.mxu0 0.0
    %1317 = vmatpush1.msra.mxu0 0.0
    %1318 = vmatprep.subr.mxu0 0.0
    %1319 = vmatpush1.msra.mxu0 0.0
    %1320 = vmatprep.subr.mxu0 0.0
    %1321 = vmatpush1.msra.mxu0 0.0
    %1322 = vmatprep.subr.mxu0 0.0
    %1323 = vmatpush1.msra.mxu0 0.0
    %1324 = vmatprep.subr.mxu0 0.0
    %1325 = vmatpush1.msra.mxu0 0.0
    %1326 = vmatprep.subr.mxu0 0.0
    %1327 = vmatpush1.msra.mxu0 0.0
    %1328 = vmatprep.subr.mxu0 0.0
    %1329 = vmatpush1.msra.mxu0 0.0
    %1330 = vmatprep.subr.mxu0 0.0
    %1331 = vmatpush1.msra.mxu0 0.0
    %1332 = vmatprep.subr.mxu0 0.0
    %1333 = vmatpush1.msra.mxu0 0.0
    %1334 = vmatprep.subr.mxu0 0.0
    %1335 = vmatpush1.msra.mxu0 0.0
    %1336 = vmatprep.subr.mxu0 0.0
    %1337 = vmatpush1.msra.mxu0 0.0
    %1338 = vmatprep.subr.mxu0 0.0
    %1339 = vmatpush1.msra.mxu0 0.0
    %1340 = vmatprep.subr.mxu0 0.0
    %1341 = vmatpush1.msra.mxu0 0.0
    %1342 = vmatprep.subr.mxu0 0.0
    %1343 = vmatpush1.msra.mxu0 0.0
    %1344 = vmatprep.subr.mxu0 0.0
    %1345 = vmatpush1.msra.mxu0 0.0
    %1346 = vmatprep.subr.mxu0 0.0
    %1347 = vmatpush1.msra.mxu0 0.0
    %1348 = vmatprep.subr.mxu0 0.0
    %1349 = vmatpush1.msra.mxu0 0.0
    %1350 = vmatprep.subr.mxu0 0.0
    %1351 = vmatpush1.msra.mxu0 0.0
    %1352 = vmatprep.subr.mxu0 0.0
    %1353 = vmatpush1.msra.mxu0 0.0
    %1354 = vmatprep.subr.mxu0 0.0
    %1355 = vmatpush1.msra.mxu0 0.0
    %1356 = vmatprep.mubr.f32.mxu0 0.0
    %1357 = vmatmul.mubr.f32.gmra.mrb[0].mxu0 %v1269
    %v1358 = vpop.f32.mrb[0].mxu0
    %v1359 = vadd.f32 %v1230, %v1358
    %v1360 = vpop.f32.mrb[0].mxu0
    %1361 = vmatprep.mubr.f32.mxu0 0.0
    %1362 = vmatmul.mubr.f32.gmra.mrb[0].mxu0 %v1272
    %v1363 = vpop.f32.mrb[0].mxu0
    %v1364 = vadd.f32 %v1235, %v1363
    %v1365 = vpop.f32.mrb[0].mxu0
    %1366 = vmatprep.mubr.f32.mxu0 0.0
    %1367 = vmatmul.mubr.f32.gmra.mrb[0].mxu0 %v1275
    %v1368 = vpop.f32.mrb[0].mxu0
    %v1369 = vadd.f32 %v1240, %v1368
    %v1370 = vpop.f32.mrb[0].mxu0
    %1371 = vmatprep.mubr.f32.mxu0 0.0
    %1372 = vmatmul.mubr.f32.gmra.mrb[0].mxu0 %v1278
    %v1373 = vpop.f32.mrb[0].mxu0
    %v1374 = vadd.f32 %v1245, %v1373
    %v1375 = vpop.f32.mrb[0].mxu0
    %1376 = vmatprep.mubr.f32.mxu0 0.0
    %1377 = vmatmul.mubr.f32.gmra.mrb[0].mxu0 %v1281
    %v1378 = vpop.f32.mrb[0].mxu0
    %v1379 = vadd.f32 %v1250, %v1378
    %v1380 = vpop.f32.mrb[0].mxu0
    %1381 = vmatprep.mubr.f32.mxu0 0.0
    %1382 = vmatmul.mubr.f32.gmra.mrb[0].mxu0 %v1284
    %v1383 = vpop.f32.mrb[0].mxu0
    %v1384 = vadd.f32 %v1255, %v1383
    %v1385 = vpop.f32.mrb[0].mxu0
    %1386 = vmatprep.mubr.f32.mxu0 0.0
    %1387 = vmatmul.mubr.f32.gmra.mrb[0].mxu0 %v1287
    %v1388 = vpop.f32.mrb[0].mxu0
    %v1389 = vadd.f32 %v1260, %v1388
    %v1390 = vpop.f32.mrb[0].mxu0
    %1391 = vmatprep.mubr.f32.mxu0 0.0
    %1392 = vmatmul.mubr.f32.gmra.mrb[0].mxu0 %v1290
    %v1393 = vpop.f32.mrb[0].mxu0
    %v1394 = vadd.f32 %v1265, %v1393
    %v1395 = vpop.f32.mrb[0].mxu0
    %1396 = vdwg.mxu0
    %v1397 = vld [vmem:[%s6] sm:$0x1]
    %v1399 = vlaneseq
    %v1400 = vshrl.u32 %v1399, 7
    %v1401 = vsub.s32 0, %v1400
    %v1402 = vrot.slane %v1397, %v1401
    %v1404 = vadd.f32 %v1359, %v1402
    %v1405 = vadd.f32 %v1364, %v1402
    %v1406 = vadd.f32 %v1369, %v1402
    %v1407 = vadd.f32 %v1374, %v1402
    %v1408 = vadd.f32 %v1379, %v1402
    %v1409 = vadd.f32 %v1384, %v1402
    %v1410 = vadd.f32 %v1389, %v1402
    %v1411 = vadd.f32 %v1394, %v1402
    %v1412 = vtanh.pop %v1404
    %v1413 = vtanh.pop %v1405
    %v1414 = vtanh.pop %v1406
    %v1415 = vtanh.pop %v1407
    %v1416 = vtanh.pop %v1408
    %v1417 = vtanh.pop %v1409
    %v1418 = vtanh.pop %v1410
    %v1419 = vtanh.pop %v1411
    %v1420 = vld [vmem:[%s7] sm:$0x1]
    %v1422 = vlaneseq
    %v1423 = vshrl.u32 %v1422, 7
    %v1424 = vsub.s32 0, %v1423
    %v1425 = vrot.slane %v1420, %v1424
    %v1427 = vmul.f32 %v1412, %v1425
    %v1428 = vmul.f32 %v1413, %v1425
    %v1429 = vmul.f32 %v1414, %v1425
    %v1430 = vmul.f32 %v1415, %v1425
    %v1431 = vmul.f32 %v1416, %v1425
    %v1432 = vmul.f32 %v1417, %v1425
    %v1433 = vmul.f32 %v1418, %v1425
    %v1434 = vmul.f32 %v1419, %v1425
    %v1435 = vsel %vm112, %v1427, 0.0
    %1436 = vadd.xlane.f32.xlu0 %v1435
    %v1437 = vpop.xlane.xlu0 %1436
    %v1438 = vsel %vm112, %v1428, 0.0
    %1439 = vadd.xlane.f32.xlu0 %v1438
    %v1440 = vpop.xlane.xlu0 %1439
    %v1441 = vsel %vm112, %v1429, 0.0
    %1442 = vadd.xlane.f32.xlu0 %v1441
    %v1443 = vpop.xlane.xlu0 %1442
    %v1444 = vsel %vm112, %v1430, 0.0
    %1445 = vadd.xlane.f32.xlu0 %v1444
    %v1446 = vpop.xlane.xlu0 %1445
    %v1447 = vsel %vm112, %v1431, 0.0
    %1448 = vadd.xlane.f32.xlu0 %v1447
    %v1449 = vpop.xlane.xlu0 %1448
    %v1450 = vsel %vm112, %v1432, 0.0
    %1451 = vadd.xlane.f32.xlu0 %v1450
    %v1452 = vpop.xlane.xlu0 %1451
    %v1453 = vsel %vm112, %v1433, 0.0
    %1454 = vadd.xlane.f32.xlu0 %v1453
    %v1455 = vpop.xlane.xlu0 %1454
    %v1456 = vsel %vm112, %v1434, 0.0
    %1457 = vadd.xlane.f32.xlu0 %v1456
    %v1458 = vpop.xlane.xlu0 %1457
    %v1459 = vmax.f32 %v1437, %v1449
    %v1460 = vmax.f32 %v1440, %v1452
    %v1461 = vmax.f32 %v1443, %v1455
    %v1462 = vmax.f32 %v1446, %v1458
    %v1463 = vmax.f32 %v1459, %v1460
    %v1464 = vmax.f32 %v1461, %v1462
    %v1465 = vmax.f32 %v1463, %v1464
    %v1466 = vsub.f32 %v1437, %v1465
    %v1467 = vsub.f32 %v1440, %v1465
    %v1468 = vsub.f32 %v1443, %v1465
    %v1469 = vsub.f32 %v1446, %v1465
    %v1470 = vsub.f32 %v1449, %v1465
    %v1471 = vsub.f32 %v1452, %v1465
    %v1472 = vsub.f32 %v1455, %v1465
    %v1473 = vsub.f32 %v1458, %v1465
    %v1474 = vmul.f32 %v1466, 1.442695
    %v1475 = vpow.pop %v1474
    %v1476 = vmul.f32 %v1467, 1.442695
    %v1477 = vpow.pop %v1476
    %v1478 = vmul.f32 %v1468, 1.442695
    %v1479 = vpow.pop %v1478
    %v1480 = vmul.f32 %v1469, 1.442695
    %v1481 = vpow.pop %v1480
    %v1482 = vmul.f32 %v1470, 1.442695
    %v1483 = vpow.pop %v1482
    %v1484 = vmul.f32 %v1471, 1.442695
    %v1485 = vpow.pop %v1484
    %v1486 = vmul.f32 %v1472, 1.442695
    %v1487 = vpow.pop %v1486
    %v1488 = vmul.f32 %v1473, 1.442695
    %v1489 = vpow.pop %v1488
    %v1490 = vadd.f32 %v1475, %v1477
    %v1491 = vadd.f32 %v1490, %v1479
    %v1492 = vadd.f32 %v1491, %v1481
    %v1493 = vadd.f32 %v1492, %v1483
    %v1494 = vadd.f32 %v1493, %v1485
    %v1495 = vadd.f32 %v1494, %v1487
    %v1496 = vadd.f32 %v1495, %v1489
    %v1497 = vrcp.pop %v1496
    %v1498 = vmul.f32 %v1475, %v1497
    %v1499 = vmul.f32 %v1477, %v1497
    %v1500 = vmul.f32 %v1479, %v1497
    %v1501 = vmul.f32 %v1481, %v1497
    %v1502 = vmul.f32 %v1483, %v1497
    %v1503 = vmul.f32 %v1485, %v1497
    %v1504 = vmul.f32 %v1487, %v1497
    %v1505 = vmul.f32 %v1489, %v1497
    %v1506 = vmul.f32 %v1115, %v1498
    %v1507 = vmul.f32 %v1116, %v1499
    %v1508 = vmul.f32 %v1117, %v1500
    %v1509 = vmul.f32 %v1118, %v1501
    %v1510 = vmul.f32 %v1119, %v1502
    %v1511 = vmul.f32 %v1120, %v1503
    %v1512 = vmul.f32 %v1121, %v1504
    %v1513 = vmul.f32 %v1122, %v1505
    %v1514 = vsel %vm388, %v1506, 0.0
    %v1515 = vsel %vm388, %v1507, 0.0
    %v1516 = vadd.f32 %v1514, %v1515
    %v1517 = vsel %vm388, %v1508, 0.0
    %v1518 = vadd.f32 %v1516, %v1517
    %v1519 = vsel %vm388, %v1509, 0.0
    %v1520 = vadd.f32 %v1518, %v1519
    %v1521 = vsel %vm388, %v1510, 0.0
    %v1522 = vadd.f32 %v1520, %v1521
    %v1523 = vsel %vm388, %v1511, 0.0
    %v1524 = vadd.f32 %v1522, %v1523
    %v1525 = vsel %vm388, %v1512, 0.0
    %v1526 = vadd.f32 %v1524, %v1525
    %v1527 = vsel %vm388, %v1513, 0.0
    %v1528 = vadd.f32 %v1526, %v1527
    %v1529 = vmul.f32 %v1123, %v1498
    %v1530 = vmul.f32 %v1124, %v1499
    %v1531 = vmul.f32 %v1125, %v1500
    %v1532 = vmul.f32 %v1126, %v1501
    %v1533 = vmul.f32 %v1127, %v1502
    %v1534 = vmul.f32 %v1128, %v1503
    %v1535 = vmul.f32 %v1129, %v1504
    %v1536 = vmul.f32 %v1130, %v1505
    %v1537 = vsel %vm388, %v1529, 0.0
    %v1538 = vsel %vm388, %v1530, 0.0
    %v1539 = vadd.f32 %v1537, %v1538
    %v1540 = vsel %vm388, %v1531, 0.0
    %v1541 = vadd.f32 %v1539, %v1540
    %v1542 = vsel %vm388, %v1532, 0.0
    %v1543 = vadd.f32 %v1541, %v1542
    %v1544 = vsel %vm388, %v1533, 0.0
    %v1545 = vadd.f32 %v1543, %v1544
    %v1546 = vsel %vm388, %v1534, 0.0
    %v1547 = vadd.f32 %v1545, %v1546
    %v1548 = vsel %vm388, %v1535, 0.0
    %v1549 = vadd.f32 %v1547, %v1548
    %v1550 = vsel %vm388, %v1536, 0.0
    %v1551 = vadd.f32 %v1549, %v1550
    %v1552 = vld [vmem:[%s8] sm:$0xff]
    %v1553 = vld [vmem:[%s8 + $0x8] sm:$0xff]
    %v1554 = vld [vmem:[%s8 + $0x10] sm:$0xff]
    %v1555 = vld [vmem:[%s8 + $0x18] sm:$0xff]
    %v1556 = vld [vmem:[%s8 + $0x20] sm:$0xff]
    %v1557 = vld [vmem:[%s8 + $0x28] sm:$0xff]
    %v1558 = vld [vmem:[%s8 + $0x30] sm:$0xff]
    %v1559 = vld [vmem:[%s8 + $0x38] sm:$0xff]
    %v1561 = vsel %vm388, %v1551, 0
    %1563 = vmatprep.subr.mxu0 0.0
    %1564 = vmatpush1.msra.mxu0 %v1556
    %1565 = vmatprep.subr.mxu0 0.0
    %1566 = vmatpush1.msra.mxu0 %v1557
    %1567 = vmatprep.subr.mxu0 0.0
    %1568 = vmatpush1.msra.mxu0 %v1558
    %1569 = vmatprep.subr.mxu0 0.0
    %1570 = vmatpush1.msra.mxu0 %v1559
    %1571 = vmatprep.subr.mxu0 0.0
    %1572 = vmatpush1.msra.mxu0 0.0
    %1573 = vmatprep.subr.mxu0 0.0
    %1574 = vmatpush1.msra.mxu0 0.0
    %1575 = vmatprep.subr.mxu0 0.0
    %1576 = vmatpush1.msra.mxu0 0.0
    %1577 = vmatprep.subr.mxu0 0.0
    %1578 = vmatpush1.msra.mxu0 0.0
    %1579 = vmatprep.subr.mxu0 0.0
    %1580 = vmatpush1.msra.mxu0 0.0
    %1581 = vmatprep.subr.mxu0 0.0
    %1582 = vmatpush1.msra.mxu0 0.0
    %1583 = vmatprep.subr.mxu0 0.0
    %1584 = vmatpush1.msra.mxu0 0.0
    %1585 = vmatprep.subr.mxu0 0.0
    %1586 = vmatpush1.msra.mxu0 0.0
    %1587 = vmatprep.subr.mxu0 0.0
    %1588 = vmatpush1.msra.mxu0 0.0
    %1589 = vmatprep.subr.mxu0 0.0
    %1590 = vmatpush1.msra.mxu0 0.0
    %1591 = vmatprep.subr.mxu0 0.0
    %1592 = vmatpush1.msra.mxu0 0.0
    %1593 = vmatprep.subr.mxu0 0.0
    %1594 = vmatpush1.msra.mxu0 0.0
    %1595 = vmatprep.subr.mxu0 0.0
    %1596 = vmatpush1.msra.mxu0 0.0
    %1597 = vmatprep.subr.mxu0 0.0
    %1598 = vmatpush1.msra.mxu0 0.0
    %1599 = vmatprep.subr.mxu0 0.0
    %1600 = vmatpush1.msra.mxu0 0.0
    %1601 = vmatprep.subr.mxu0 0.0
    %1602 = vmatpush1.msra.mxu0 0.0
    %1603 = vmatprep.subr.mxu0 0.0
    %1604 = vmatpush1.msra.mxu0 0.0
    %1605 = vmatprep.subr.mxu0 0.0
    %1606 = vmatpush1.msra.mxu0 0.0
    %1607 = vmatprep.subr.mxu0 0.0
    %1608 = vmatpush1.msra.mxu0 0.0
    %1609 = vmatprep.subr.mxu0 0.0
    %1610 = vmatpush1.msra.mxu0 0.0
    %1611 = vmatprep.subr.mxu0 0.0
    %1612 = vmatpush1.msra.mxu0 0.0
    %1613 = vmatprep.subr.mxu0 0.0
    %1614 = vmatpush1.msra.mxu0 0.0
    %1615 = vmatprep.subr.mxu0 0.0
    %1616 = vmatpush1.msra.mxu0 0.0
    %1617 = vmatprep.subr.mxu0 0.0
    %1618 = vmatpush1.msra.mxu0 0.0
    %1619 = vmatprep.subr.mxu0 0.0
    %1620 = vmatpush1.msra.mxu0 0.0
    %1621 = vmatprep.subr.mxu0 0.0
    %1622 = vmatpush1.msra.mxu0 0.0
    %1623 = vmatprep.subr.mxu0 0.0
    %1624 = vmatpush1.msra.mxu0 0.0
    %1625 = vmatprep.subr.mxu0 0.0
    %1626 = vmatpush1.msra.mxu0 0.0
    %1627 = vmatprep.mubr.f32.mxu0 0.0
    %1628 = vmatmul.mubr.f32.gmra.mrb[0].mxu0 %v1561
    %v1629 = vpop.f32.mrb[0].mxu0
    %v1630 = vadd.f32 0.0, %v1629
    %v1631 = vpop.f32.mrb[0].mxu0
    %1632 = vdwg.mxu0
    %v1634 = vsel %vm388, %v1528, 0
    %1636 = vmatprep.subr.mxu0 0.0
    %1637 = vmatpush1.msra.mxu0 %v1552
    %1638 = vmatprep.subr.mxu0 0.0
    %1639 = vmatpush1.msra.mxu0 %v1553
    %1640 = vmatprep.subr.mxu0 0.0
    %1641 = vmatpush1.msra.mxu0 %v1554
    %1642 = vmatprep.subr.mxu0 0.0
    %1643 = vmatpush1.msra.mxu0 %v1555
    %1644 = vmatprep.subr.mxu0 0.0
    %1645 = vmatpush1.msra.mxu0 0.0
    %1646 = vmatprep.subr.mxu0 0.0
    %1647 = vmatpush1.msra.mxu0 0.0
    %1648 = vmatprep.subr.mxu0 0.0
    %1649 = vmatpush1.msra.mxu0 0.0
    %1650 = vmatprep.subr.mxu0 0.0
    %1651 = vmatpush1.msra.mxu0 0.0
    %1652 = vmatprep.subr.mxu0 0.0
    %1653 = vmatpush1.msra.mxu0 0.0
    %1654 = vmatprep.subr.mxu0 0.0
    %1655 = vmatpush1.msra.mxu0 0.0
    %1656 = vmatprep.subr.mxu0 0.0
    %1657 = vmatpush1.msra.mxu0 0.0
    %1658 = vmatprep.subr.mxu0 0.0
    %1659 = vmatpush1.msra.mxu0 0.0
    %1660 = vmatprep.subr.mxu0 0.0
    %1661 = vmatpush1.msra.mxu0 0.0
    %1662 = vmatprep.subr.mxu0 0.0
    %1663 = vmatpush1.msra.mxu0 0.0
    %1664 = vmatprep.subr.mxu0 0.0
    %1665 = vmatpush1.msra.mxu0 0.0
    %1666 = vmatprep.subr.mxu0 0.0
    %1667 = vmatpush1.msra.mxu0 0.0
    %1668 = vmatprep.subr.mxu0 0.0
    %1669 = vmatpush1.msra.mxu0 0.0
    %1670 = vmatprep.subr.mxu0 0.0
    %1671 = vmatpush1.msra.mxu0 0.0
    %1672 = vmatprep.subr.mxu0 0.0
    %1673 = vmatpush1.msra.mxu0 0.0
    %1674 = vmatprep.subr.mxu0 0.0
    %1675 = vmatpush1.msra.mxu0 0.0
    %1676 = vmatprep.subr.mxu0 0.0
    %1677 = vmatpush1.msra.mxu0 0.0
    %1678 = vmatprep.subr.mxu0 0.0
    %1679 = vmatpush1.msra.mxu0 0.0
    %1680 = vmatprep.subr.mxu0 0.0
    %1681 = vmatpush1.msra.mxu0 0.0
    %1682 = vmatprep.subr.mxu0 0.0
    %1683 = vmatpush1.msra.mxu0 0.0
    %1684 = vmatprep.subr.mxu0 0.0
    %1685 = vmatpush1.msra.mxu0 0.0
    %1686 = vmatprep.subr.mxu0 0.0
    %1687 = vmatpush1.msra.mxu0 0.0
    %1688 = vmatprep.subr.mxu0 0.0
    %1689 = vmatpush1.msra.mxu0 0.0
    %1690 = vmatprep.subr.mxu0 0.0
    %1691 = vmatpush1.msra.mxu0 0.0
    %1692 = vmatprep.subr.mxu0 0.0
    %1693 = vmatpush1.msra.mxu0 0.0
    %1694 = vmatprep.subr.mxu0 0.0
    %1695 = vmatpush1.msra.mxu0 0.0
    %1696 = vmatprep.subr.mxu0 0.0
    %1697 = vmatpush1.msra.mxu0 0.0
    %1698 = vmatprep.subr.mxu0 0.0
    %1699 = vmatpush1.msra.mxu0 0.0
    %1700 = vmatprep.mubr.f32.mxu0 0.0
    %1701 = vmatmul.mubr.f32.gmra.mrb[0].mxu0 %v1634
    %v1702 = vpop.f32.mrb[0].mxu0
    %v1703 = vadd.f32 %v1630, %v1702
    %v1704 = vpop.f32.mrb[0].mxu0
    %1705 = vdwg.mxu0
    %v1706 = vld [vmem:[%s9] sm:$0x1]
    %v1708 = vlaneseq
    %v1709 = vshrl.u32 %v1708, 7
    %v1710 = vsub.s32 0, %v1709
    %v1711 = vrot.slane %v1706, %v1710
    %v1713 = vadd.f32 %v1703, %v1711
    %vm1714 = vcmask 31744
    %1715 = vst.msk [vmem:[%s10] sm:$0xff] %vm1714, %v1713
    // Predicated region
    $region54: #{tpu_custom_call.1} parent=1 // pred_check
      _
    $region55: #{tpu_custom_call.1} parent=1 // pred_check_branch
      %1717 = sbr.rel (0) target = $region57
    $region56: #{tpu_custom_call.1} parent=1 // pred_region
      _
    $region57: #{tpu_custom_call.1} parent=1 // pred_fallthru
      _
    // Predicated region
    $region58: #{tpu_custom_call.1} parent=1 // pred_check
      _
    $region59: #{tpu_custom_call.1} parent=1 // pred_check_branch
      %1719 = sbr.rel (0) target = $region61
    $region60: #{tpu_custom_call.1} parent=1 // pred_region
      _
    $region61: #{tpu_custom_call.1} parent=1 // pred_fallthru
      _
    %1720 = vsyncpa [#allocation6], 1
    %1721 = vsyncpa [#allocation8], 1

</llo_original>
